<compile_context>
chip_gen: v7x
topology: tpu7x:2x2x1
jax: 0.10.0
libtpu: 0.0.40
codegen_flags: <defaults>
</compile_context>

<pallas_src>
import functools

import jax
import jax.numpy as jnp
import numpy as np
from jax.experimental import pallas as pl
from jax.experimental.pallas import tpu as pltpu

# ---- model hyperparameters (model_params) ----
EMBEDDING_DIM = 32
HEAD_NUM = 4
QKV_DIM = 8
FF_HIDDEN_DIM = 64
EPS = 1e-5  # nn.InstanceNorm1d default eps

# ---- problem sizes ----
BATCH = 2
ROW_CNT = 8
COL_CNT = 8


def _encoding_block_kernel(x_ref, wa_ref, wb_ref, out_ref, *, B, R, C):
    f32 = jnp.float32
    E = EMBEDDING_DIM
    D = QKV_DIM
    H = HEAD_NUM
    HD = H * D
    F = FF_HIDDEN_DIM
    NR = B * R

    x = x_ref[...].astype(f32)            # (B*(R+C), E): rows 0..B*R-1 = row_emb, rest = col_emb
    wa = wa_ref[...].astype(f32)          # (E, 3*HD + E + F)
    wb = wb_ref[...].astype(f32)          # (F + 8, F): rows 0..F-1 = W2 (lanes 0..E-1), rows F.. = small params

    row = x[:NR, :]                       # (B*R, E) residual input

    # --- unpack packed params (static slices, all in registers) ---
    wqkv = wa[:, 0:3 * HD]                # (E, 3*HD), Wq pre-scaled by 1/sqrt(D)
    wc = wa[:, 3 * HD:3 * HD + E]         # (HD, E)
    w1 = wa[:, 3 * HD + E:3 * HD + E + F]  # (E, F)
    w2 = wb[0:F, 0:E]                     # (F, E)
    sp = wb[F:F + 8, :]                   # (8, F) small params
    bc = sp[0:1, :E]
    g1 = sp[1:2, :E]
    beta1 = sp[2:3, :E]
    bf2 = sp[3:4, :E]
    g2 = sp[4:5, :E]
    beta2 = sp[5:6, :E]
    bf1 = sp[6:7, :]                      # (1, F)

    # --- single fused projection matmul: [row;col] @ [Wq*s | Wk | Wv] ---
    proj = jnp.dot(x, wqkv, preferred_element_type=f32)   # (B*(R+C), 3*HD)
    q = proj[:NR, 0:HD]                   # row @ (Wq * 1/sqrt(D))
    k = proj[NR:, HD:2 * HD]              # col @ Wk
    v = proj[NR:, 2 * HD:3 * HD]          # col @ Wv

    # --- multi-head attention; combine accumulated in registers (no VMEM scratch) ---
    mh_out = None
    for h in range(H):
        sl = slice(h * D, (h + 1) * D)
        qh = q[:, sl].reshape(B, R, D)
        kh = k[:, sl].reshape(B, C, D)
        vh = v[:, sl].reshape(B, C, D)
        s = jnp.einsum("brd,bcd->brc", qh, kh,
                       preferred_element_type=f32)          # scaled scores (B, R, C)
        m = jnp.max(s, axis=-1, keepdims=True)
        p = jnp.exp(s - m)
        l = jnp.sum(p, axis=-1, keepdims=True)
        oh = jnp.einsum("brc,bcd->brd", p, vh,
                        preferred_element_type=f32)          # unnormalized
        oh = oh * (1.0 / l)                                  # deferred, exact softmax denom
        contrib = jnp.dot(oh.reshape(NR, D), wc[sl, :],
                          preferred_element_type=f32)        # (B*R, E)
        mh_out = contrib if mh_out is None else mh_out + contrib
    mh_out = mh_out + bc                                     # multi_head_combine bias

    # --- add & InstanceNorm1d: normalize over seq (R) per batch, per channel ---
    def inst_norm(x2d, g, b):
        xx = x2d.reshape(B, R, E)
        mean = jnp.mean(xx, axis=1, keepdims=True)
        var = jnp.mean((xx - mean) ** 2, axis=1, keepdims=True)   # biased variance
        y = (xx - mean) * jax.lax.rsqrt(var + EPS)
        return y.reshape(NR, E) * g + b

    out1 = inst_norm(row + mh_out, g1, beta1)

    # --- feed forward: Linear -> ReLU -> Linear ---
    f1 = jnp.maximum(jnp.dot(out1, w1, preferred_element_type=f32) + bf1, 0.0)
    f2 = jnp.dot(f1, w2, preferred_element_type=f32) + bf2

    out3 = inst_norm(out1 + f2, g2, beta2)
    out_ref[...] = out3.astype(out_ref.dtype)


def pack_params(params):
    """One-time (init-time) packing of all weights/biases into 2 DMA-friendly slabs."""
    E = EMBEDDING_DIM
    HD = HEAD_NUM * QKV_DIM
    F = FF_HIDDEN_DIM
    assert F >= E, "small-param slab packing assumes FF_HIDDEN_DIM >= EMBEDDING_DIM"
    assert params["Wc"].shape[0] == E, "32-row weight slab packing assumes head_num*qkv_dim == embedding_dim"

    scale = np.float32(1.0 / np.sqrt(QKV_DIM))
    # fold attention scale into Wq; fuse Q|K|V; stack Wc and W1 alongside (all E rows)
    wqkv = jnp.concatenate([params["Wq"] * scale, params["Wk"], params["Wv"]], axis=1)  # (E, 3*HD)
    wa = jnp.concatenate([wqkv, params["Wc"], params["W1"]], axis=1).astype(jnp.float32)  # (E, 3*HD+E+F)

    def pad_row(p):
        p = jnp.asarray(p, jnp.float32).reshape(1, -1)
        return jnp.pad(p, ((0, 0), (0, F - p.shape[1])))

    sp = jnp.concatenate(
        [pad_row(params["bc"]), pad_row(params["g1"]), pad_row(params["beta1"]),
         pad_row(params["bf2"]), pad_row(params["g2"]), pad_row(params["beta2"]),
         pad_row(params["bf1"]), jnp.zeros((1, F), jnp.float32)],
        axis=0)                                                            # (8, F)
    w2p = jnp.pad(params["W2"].astype(jnp.float32), ((0, 0), (0, F - E)))  # (F, F)
    wb = jnp.concatenate([w2p, sp], axis=0)                                # (F+8, F)
    return {"wa": wa, "wb": wb}


@jax.jit
def self_encoding_block(row_emb, col_emb, packed):
    B, R, E = row_emb.shape
    _, C, _ = col_emb.shape

    # fold batch into the sublane dimension and stack row/col activations (layout plumbing)
    x = jnp.concatenate([row_emb.reshape(B * R, E), col_emb.reshape(B * C, E)], axis=0)

    kernel = functools.partial(_encoding_block_kernel, B=B, R=R, C=C)
    vmem = pl.BlockSpec(memory_space=pltpu.MemorySpace.VMEM)

    out2 = pl.pallas_call(
        kernel,
        out_shape=jax.ShapeDtypeStruct((B * R, E), row_emb.dtype),
        in_specs=[vmem, vmem, vmem],
        out_specs=vmem,
    )(x, packed["wa"], packed["wb"])

    return out2.reshape(B, R, E)


def reference_block(row_emb, col_emb, params):
    """Pure-JAX reference mirroring the PyTorch forward."""
    B, R, E = row_emb.shape
    q = row_emb @ params["Wq"]
    k = col_emb @ params["Wk"]
    v = col_emb @ params["Wv"]

    def by_heads(x):  # (B, N, H*D) -> (B, H, N, D)
        Bn, N, _ = x.shape
        return jnp.transpose(x.reshape(Bn, N, HEAD_NUM, QKV_DIM), (0, 2, 1, 3))

    qh, kh, vh = by_heads(q), by_heads(k), by_heads(v)
    score = jnp.einsum("bhrd,bhcd->bhrc", qh, kh) / np.sqrt(QKV_DIM)
    attn = jax.nn.softmax(score, axis=-1)
    out = jnp.einsum("bhrc,bhcd->bhrd", attn, vh)
    out_concat = jnp.transpose(out, (0, 2, 1, 3)).reshape(B, R, HEAD_NUM * QKV_DIM)

    mh_out = out_concat @ params["Wc"] + params["bc"]

    def inst_norm(x, g, b):
        mean = jnp.mean(x, axis=1, keepdims=True)
        var = jnp.mean((x - mean) ** 2, axis=1, keepdims=True)
        return (x - mean) / jnp.sqrt(var + EPS) * g + b

    out1 = inst_norm(row_emb + mh_out, params["g1"], params["beta1"])
    ff = jnp.maximum(out1 @ params["W1"] + params["bf1"], 0.0) @ params["W2"] + params["bf2"]
    return inst_norm(out1 + ff, params["g2"], params["beta2"])


def make_params(key):
    ks = jax.random.split(key, 10)
    HD = HEAD_NUM * QKV_DIM
    s = 0.1
    params = {
        "Wq": jax.random.normal(ks[0], (EMBEDDING_DIM, HD), jnp.float32) * s,
        "Wk": jax.random.normal(ks[1], (EMBEDDING_DIM, HD), jnp.float32) * s,
        "Wv": jax.random.normal(ks[2], (EMBEDDING_DIM, HD), jnp.float32) * s,
        "Wc": jax.random.normal(ks[3], (HD, EMBEDDING_DIM), jnp.float32) * s,
        "bc": jax.random.normal(ks[4], (1, EMBEDDING_DIM), jnp.float32) * s,
        # InstanceNorm affine params (PyTorch default: weight=1, bias=0)
        "g1": jnp.ones((1, EMBEDDING_DIM), jnp.float32),
        "beta1": jnp.zeros((1, EMBEDDING_DIM), jnp.float32),
        "W1": jax.random.normal(ks[5], (EMBEDDING_DIM, FF_HIDDEN_DIM), jnp.float32) * s,
        "bf1": jax.random.normal(ks[6], (1, FF_HIDDEN_DIM), jnp.float32) * s,
        "W2": jax.random.normal(ks[7], (FF_HIDDEN_DIM, EMBEDDING_DIM), jnp.float32) * s,
        "bf2": jax.random.normal(ks[8], (1, EMBEDDING_DIM), jnp.float32) * s,
        "g2": jnp.ones((1, EMBEDDING_DIM), jnp.float32),
        "beta2": jnp.zeros((1, EMBEDDING_DIM), jnp.float32),
    }
    return params


if __name__ == "__main__":
    key = jax.random.PRNGKey(0)
    k_row, k_col, k_par = jax.random.split(key, 3)

    row_emb = jax.random.normal(k_row, (BATCH, ROW_CNT, EMBEDDING_DIM), jnp.float32)
    col_emb = jax.random.normal(k_col, (BATCH, COL_CNT, EMBEDDING_DIM), jnp.float32)
    params = make_params(k_par)

    # init-time packing (done once, not on the per-call path)
    packed = jax.tree_util.tree_map(jax.block_until_ready, pack_params(params))

    out = jax.block_until_ready(self_encoding_block(row_emb, col_emb, packed))

    ref = jax.block_until_ready(reference_block(row_emb, col_emb, params))
    np.testing.assert_allclose(np.asarray(out), np.asarray(ref), rtol=1e-4, atol=1e-4)

    assert out.shape == (BATCH, ROW_CNT, EMBEDDING_DIM)
    print("KERNEL_OK")
</pallas_src>

<mosaic_0001>
module attributes {stable_mosaic.version = 11 : i64} {
  func.func @_encoding_block_kernel(%arg0: memref<32x32xf32, #tpu.memory_space<vmem>>, %arg1: memref<32x192xf32, #tpu.memory_space<vmem>>, %arg2: memref<72x64xf32, #tpu.memory_space<vmem>>, %arg3: memref<16x32xf32, #tpu.memory_space<vmem>>) attributes {dimension_semantics = [], scalar_prefetch = 0 : i64, scratch_operands = 0 : i64, tpu.core_type = #tpu.core_type<tc>} {
    %c0 = arith.constant 0 : index
    %c0_0 = arith.constant 0 : index
    %0 = vector.load %arg0[%c0, %c0_0] : memref<32x32xf32, #tpu.memory_space<vmem>>, vector<32x32xf32>
    %c0_1 = arith.constant 0 : index
    %c0_2 = arith.constant 0 : index
    %1 = vector.load %arg1[%c0_1, %c0_2] : memref<32x192xf32, #tpu.memory_space<vmem>>, vector<32x192xf32>
    %c0_3 = arith.constant 0 : index
    %c0_4 = arith.constant 0 : index
    %2 = vector.load %arg2[%c0_3, %c0_4] : memref<72x64xf32, #tpu.memory_space<vmem>>, vector<72x64xf32>
    %3 = vector.extract_strided_slice %0 {offsets = [0, 0], sizes = [16, 32], strides = [1, 1]} : vector<32x32xf32> to vector<16x32xf32>
    %4 = vector.extract_strided_slice %1 {offsets = [0, 0], sizes = [32, 96], strides = [1, 1]} : vector<32x192xf32> to vector<32x96xf32>
    %5 = vector.extract_strided_slice %1 {offsets = [0, 96], sizes = [32, 32], strides = [1, 1]} : vector<32x192xf32> to vector<32x32xf32>
    %6 = vector.extract_strided_slice %1 {offsets = [0, 128], sizes = [32, 64], strides = [1, 1]} : vector<32x192xf32> to vector<32x64xf32>
    %7 = vector.extract_strided_slice %2 {offsets = [0, 0], sizes = [64, 32], strides = [1, 1]} : vector<72x64xf32> to vector<64x32xf32>
    %8 = vector.extract_strided_slice %2 {offsets = [64, 0], sizes = [8, 64], strides = [1, 1]} : vector<72x64xf32> to vector<8x64xf32>
    %9 = vector.extract_strided_slice %8 {offsets = [0, 0], sizes = [1, 32], strides = [1, 1]} : vector<8x64xf32> to vector<1x32xf32>
    %10 = vector.extract_strided_slice %8 {offsets = [1, 0], sizes = [1, 32], strides = [1, 1]} : vector<8x64xf32> to vector<1x32xf32>
    %11 = vector.extract_strided_slice %8 {offsets = [2, 0], sizes = [1, 32], strides = [1, 1]} : vector<8x64xf32> to vector<1x32xf32>
    %12 = vector.extract_strided_slice %8 {offsets = [3, 0], sizes = [1, 32], strides = [1, 1]} : vector<8x64xf32> to vector<1x32xf32>
    %13 = vector.extract_strided_slice %8 {offsets = [4, 0], sizes = [1, 32], strides = [1, 1]} : vector<8x64xf32> to vector<1x32xf32>
    %14 = vector.extract_strided_slice %8 {offsets = [5, 0], sizes = [1, 32], strides = [1, 1]} : vector<8x64xf32> to vector<1x32xf32>
    %15 = vector.extract_strided_slice %8 {offsets = [6, 0], sizes = [1, 64], strides = [1, 1]} : vector<8x64xf32> to vector<1x64xf32>
    %cst = arith.constant dense<0.000000e+00> : vector<32x96xf32>
    %16 = tpu.matmul %0, %4, %cst {dimension_numbers = #tpu.dot_dimension_numbers<[1], [0], [0], [1], [0, 0, 1, 1], [], []>} : vector<32x32xf32>, vector<32x96xf32>, vector<32x96xf32> -> vector<32x96xf32>
    %17 = vector.extract_strided_slice %16 {offsets = [0, 0], sizes = [16, 32], strides = [1, 1]} : vector<32x96xf32> to vector<16x32xf32>
    %18 = vector.extract_strided_slice %16 {offsets = [16, 32], sizes = [16, 32], strides = [1, 1]} : vector<32x96xf32> to vector<16x32xf32>
    %19 = vector.extract_strided_slice %16 {offsets = [16, 64], sizes = [16, 32], strides = [1, 1]} : vector<32x96xf32> to vector<16x32xf32>
    %20 = vector.extract_strided_slice %17 {offsets = [0, 0], sizes = [16, 8], strides = [1, 1]} : vector<16x32xf32> to vector<16x8xf32>
    %21 = vector.shape_cast %20 : vector<16x8xf32> to vector<2x8x8xf32>
    %22 = vector.extract_strided_slice %18 {offsets = [0, 0], sizes = [16, 8], strides = [1, 1]} : vector<16x32xf32> to vector<16x8xf32>
    %23 = vector.shape_cast %22 : vector<16x8xf32> to vector<2x8x8xf32>
    %24 = vector.extract_strided_slice %19 {offsets = [0, 0], sizes = [16, 8], strides = [1, 1]} : vector<16x32xf32> to vector<16x8xf32>
    %25 = vector.shape_cast %24 : vector<16x8xf32> to vector<2x8x8xf32>
    "tpu.trace_start"() <{level = 10 : i32, message = "brd,bcd->brc"}> : () -> ()
    %cst_5 = arith.constant dense<0.000000e+00> : vector<2x8x8xf32>
    %26 = tpu.matmul %21, %23, %cst_5 {dimension_numbers = #tpu.dot_dimension_numbers<[2], [2], [1], [1], [0, 0, 0, 1, 1, 1], [0], [0]>} : vector<2x8x8xf32>, vector<2x8x8xf32>, vector<2x8x8xf32> -> vector<2x8x8xf32>
    "tpu.trace_stop"() : () -> ()
    %cst_6 = arith.constant dense<0xFF800000> : vector<2x8xf32>
    %27 = vector.multi_reduction <maximumf>, %26, %cst_6 [2] : vector<2x8x8xf32> to vector<2x8xf32>
    %28 = vector.shape_cast %27 : vector<2x8xf32> to vector<2x8x1xf32>
    %29 = vector.broadcast %28 : vector<2x8x1xf32> to vector<2x8x8xf32>
    %30 = arith.subf %26, %29 : vector<2x8x8xf32>
    %31 = math.exp %30 : vector<2x8x8xf32>
    %cst_7 = arith.constant dense<0.000000e+00> : vector<2x8xf32>
    %32 = vector.multi_reduction <add>, %31, %cst_7 [2] : vector<2x8x8xf32> to vector<2x8xf32>
    %33 = vector.shape_cast %32 : vector<2x8xf32> to vector<2x8x1xf32>
    "tpu.trace_start"() <{level = 10 : i32, message = "brc,bcd->brd"}> : () -> ()
    %cst_8 = arith.constant dense<0.000000e+00> : vector<2x8x8xf32>
    %34 = tpu.matmul %31, %25, %cst_8 {dimension_numbers = #tpu.dot_dimension_numbers<[2], [1], [1], [2], [0, 0, 0, 1, 1, 2], [0], [0]>} : vector<2x8x8xf32>, vector<2x8x8xf32>, vector<2x8x8xf32> -> vector<2x8x8xf32>
    "tpu.trace_stop"() : () -> ()
    %cst_9 = arith.constant 1.000000e+00 : f32
    %35 = vector.broadcast %cst_9 : f32 to vector<2x8x1xf32>
    %36 = arith.divf %35, %33 : vector<2x8x1xf32>
    %37 = vector.broadcast %36 : vector<2x8x1xf32> to vector<2x8x8xf32>
    %38 = arith.mulf %34, %37 : vector<2x8x8xf32>
    %39 = vector.shape_cast %38 : vector<2x8x8xf32> to vector<16x8xf32>
    %40 = vector.extract_strided_slice %5 {offsets = [0, 0], sizes = [8, 32], strides = [1, 1]} : vector<32x32xf32> to vector<8x32xf32>
    %cst_10 = arith.constant dense<0.000000e+00> : vector<16x32xf32>
    %41 = tpu.matmul %39, %40, %cst_10 {dimension_numbers = #tpu.dot_dimension_numbers<[1], [0], [0], [1], [0, 0, 1, 1], [], []>} : vector<16x8xf32>, vector<8x32xf32>, vector<16x32xf32> -> vector<16x32xf32>
    %42 = vector.extract_strided_slice %17 {offsets = [0, 8], sizes = [16, 8], strides = [1, 1]} : vector<16x32xf32> to vector<16x8xf32>
    %43 = vector.shape_cast %42 : vector<16x8xf32> to vector<2x8x8xf32>
    %44 = vector.extract_strided_slice %18 {offsets = [0, 8], sizes = [16, 8], strides = [1, 1]} : vector<16x32xf32> to vector<16x8xf32>
    %45 = vector.shape_cast %44 : vector<16x8xf32> to vector<2x8x8xf32>
    %46 = vector.extract_strided_slice %19 {offsets = [0, 8], sizes = [16, 8], strides = [1, 1]} : vector<16x32xf32> to vector<16x8xf32>
    %47 = vector.shape_cast %46 : vector<16x8xf32> to vector<2x8x8xf32>
    "tpu.trace_start"() <{level = 10 : i32, message = "brd,bcd->brc"}> : () -> ()
    %cst_11 = arith.constant dense<0.000000e+00> : vector<2x8x8xf32>
    %48 = tpu.matmul %43, %45, %cst_11 {dimension_numbers = #tpu.dot_dimension_numbers<[2], [2], [1], [1], [0, 0, 0, 1, 1, 1], [0], [0]>} : vector<2x8x8xf32>, vector<2x8x8xf32>, vector<2x8x8xf32> -> vector<2x8x8xf32>
    "tpu.trace_stop"() : () -> ()
    %cst_12 = arith.constant dense<0xFF800000> : vector<2x8xf32>
    %49 = vector.multi_reduction <maximumf>, %48, %cst_12 [2] : vector<2x8x8xf32> to vector<2x8xf32>
    %50 = vector.shape_cast %49 : vector<2x8xf32> to vector<2x8x1xf32>
    %51 = vector.broadcast %50 : vector<2x8x1xf32> to vector<2x8x8xf32>
    %52 = arith.subf %48, %51 : vector<2x8x8xf32>
    %53 = math.exp %52 : vector<2x8x8xf32>
    %cst_13 = arith.constant dense<0.000000e+00> : vector<2x8xf32>
    %54 = vector.multi_reduction <add>, %53, %cst_13 [2] : vector<2x8x8xf32> to vector<2x8xf32>
    %55 = vector.shape_cast %54 : vector<2x8xf32> to vector<2x8x1xf32>
    "tpu.trace_start"() <{level = 10 : i32, message = "brc,bcd->brd"}> : () -> ()
    %cst_14 = arith.constant dense<0.000000e+00> : vector<2x8x8xf32>
    %56 = tpu.matmul %53, %47, %cst_14 {dimension_numbers = #tpu.dot_dimension_numbers<[2], [1], [1], [2], [0, 0, 0, 1, 1, 2], [0], [0]>} : vector<2x8x8xf32>, vector<2x8x8xf32>, vector<2x8x8xf32> -> vector<2x8x8xf32>
    "tpu.trace_stop"() : () -> ()
    %cst_15 = arith.constant 1.000000e+00 : f32
    %57 = vector.broadcast %cst_15 : f32 to vector<2x8x1xf32>
    %58 = arith.divf %57, %55 : vector<2x8x1xf32>
    %59 = vector.broadcast %58 : vector<2x8x1xf32> to vector<2x8x8xf32>
    %60 = arith.mulf %56, %59 : vector<2x8x8xf32>
    %61 = vector.shape_cast %60 : vector<2x8x8xf32> to vector<16x8xf32>
    %62 = vector.extract_strided_slice %5 {offsets = [8, 0], sizes = [8, 32], strides = [1, 1]} : vector<32x32xf32> to vector<8x32xf32>
    %cst_16 = arith.constant dense<0.000000e+00> : vector<16x32xf32>
    %63 = tpu.matmul %61, %62, %cst_16 {dimension_numbers = #tpu.dot_dimension_numbers<[1], [0], [0], [1], [0, 0, 1, 1], [], []>} : vector<16x8xf32>, vector<8x32xf32>, vector<16x32xf32> -> vector<16x32xf32>
    %64 = arith.addf %41, %63 : vector<16x32xf32>
    %65 = vector.extract_strided_slice %17 {offsets = [0, 16], sizes = [16, 8], strides = [1, 1]} : vector<16x32xf32> to vector<16x8xf32>
    %66 = vector.shape_cast %65 : vector<16x8xf32> to vector<2x8x8xf32>
    %67 = vector.extract_strided_slice %18 {offsets = [0, 16], sizes = [16, 8], strides = [1, 1]} : vector<16x32xf32> to vector<16x8xf32>
    %68 = vector.shape_cast %67 : vector<16x8xf32> to vector<2x8x8xf32>
    %69 = vector.extract_strided_slice %19 {offsets = [0, 16], sizes = [16, 8], strides = [1, 1]} : vector<16x32xf32> to vector<16x8xf32>
    %70 = vector.shape_cast %69 : vector<16x8xf32> to vector<2x8x8xf32>
    "tpu.trace_start"() <{level = 10 : i32, message = "brd,bcd->brc"}> : () -> ()
    %cst_17 = arith.constant dense<0.000000e+00> : vector<2x8x8xf32>
    %71 = tpu.matmul %66, %68, %cst_17 {dimension_numbers = #tpu.dot_dimension_numbers<[2], [2], [1], [1], [0, 0, 0, 1, 1, 1], [0], [0]>} : vector<2x8x8xf32>, vector<2x8x8xf32>, vector<2x8x8xf32> -> vector<2x8x8xf32>
    "tpu.trace_stop"() : () -> ()
    %cst_18 = arith.constant dense<0xFF800000> : vector<2x8xf32>
    %72 = vector.multi_reduction <maximumf>, %71, %cst_18 [2] : vector<2x8x8xf32> to vector<2x8xf32>
    %73 = vector.shape_cast %72 : vector<2x8xf32> to vector<2x8x1xf32>
    %74 = vector.broadcast %73 : vector<2x8x1xf32> to vector<2x8x8xf32>
    %75 = arith.subf %71, %74 : vector<2x8x8xf32>
    %76 = math.exp %75 : vector<2x8x8xf32>
    %cst_19 = arith.constant dense<0.000000e+00> : vector<2x8xf32>
    %77 = vector.multi_reduction <add>, %76, %cst_19 [2] : vector<2x8x8xf32> to vector<2x8xf32>
    %78 = vector.shape_cast %77 : vector<2x8xf32> to vector<2x8x1xf32>
    "tpu.trace_start"() <{level = 10 : i32, message = "brc,bcd->brd"}> : () -> ()
    %cst_20 = arith.constant dense<0.000000e+00> : vector<2x8x8xf32>
    %79 = tpu.matmul %76, %70, %cst_20 {dimension_numbers = #tpu.dot_dimension_numbers<[2], [1], [1], [2], [0, 0, 0, 1, 1, 2], [0], [0]>} : vector<2x8x8xf32>, vector<2x8x8xf32>, vector<2x8x8xf32> -> vector<2x8x8xf32>
    "tpu.trace_stop"() : () -> ()
    %cst_21 = arith.constant 1.000000e+00 : f32
    %80 = vector.broadcast %cst_21 : f32 to vector<2x8x1xf32>
    %81 = arith.divf %80, %78 : vector<2x8x1xf32>
    %82 = vector.broadcast %81 : vector<2x8x1xf32> to vector<2x8x8xf32>
    %83 = arith.mulf %79, %82 : vector<2x8x8xf32>
    %84 = vector.shape_cast %83 : vector<2x8x8xf32> to vector<16x8xf32>
    %85 = vector.extract_strided_slice %5 {offsets = [16, 0], sizes = [8, 32], strides = [1, 1]} : vector<32x32xf32> to vector<8x32xf32>
    %cst_22 = arith.constant dense<0.000000e+00> : vector<16x32xf32>
    %86 = tpu.matmul %84, %85, %cst_22 {dimension_numbers = #tpu.dot_dimension_numbers<[1], [0], [0], [1], [0, 0, 1, 1], [], []>} : vector<16x8xf32>, vector<8x32xf32>, vector<16x32xf32> -> vector<16x32xf32>
    %87 = arith.addf %64, %86 : vector<16x32xf32>
    %88 = vector.extract_strided_slice %17 {offsets = [0, 24], sizes = [16, 8], strides = [1, 1]} : vector<16x32xf32> to vector<16x8xf32>
    %89 = vector.shape_cast %88 : vector<16x8xf32> to vector<2x8x8xf32>
    %90 = vector.extract_strided_slice %18 {offsets = [0, 24], sizes = [16, 8], strides = [1, 1]} : vector<16x32xf32> to vector<16x8xf32>
    %91 = vector.shape_cast %90 : vector<16x8xf32> to vector<2x8x8xf32>
    %92 = vector.extract_strided_slice %19 {offsets = [0, 24], sizes = [16, 8], strides = [1, 1]} : vector<16x32xf32> to vector<16x8xf32>
    %93 = vector.shape_cast %92 : vector<16x8xf32> to vector<2x8x8xf32>
    "tpu.trace_start"() <{level = 10 : i32, message = "brd,bcd->brc"}> : () -> ()
    %cst_23 = arith.constant dense<0.000000e+00> : vector<2x8x8xf32>
    %94 = tpu.matmul %89, %91, %cst_23 {dimension_numbers = #tpu.dot_dimension_numbers<[2], [2], [1], [1], [0, 0, 0, 1, 1, 1], [0], [0]>} : vector<2x8x8xf32>, vector<2x8x8xf32>, vector<2x8x8xf32> -> vector<2x8x8xf32>
    "tpu.trace_stop"() : () -> ()
    %cst_24 = arith.constant dense<0xFF800000> : vector<2x8xf32>
    %95 = vector.multi_reduction <maximumf>, %94, %cst_24 [2] : vector<2x8x8xf32> to vector<2x8xf32>
    %96 = vector.shape_cast %95 : vector<2x8xf32> to vector<2x8x1xf32>
    %97 = vector.broadcast %96 : vector<2x8x1xf32> to vector<2x8x8xf32>
    %98 = arith.subf %94, %97 : vector<2x8x8xf32>
    %99 = math.exp %98 : vector<2x8x8xf32>
    %cst_25 = arith.constant dense<0.000000e+00> : vector<2x8xf32>
    %100 = vector.multi_reduction <add>, %99, %cst_25 [2] : vector<2x8x8xf32> to vector<2x8xf32>
    %101 = vector.shape_cast %100 : vector<2x8xf32> to vector<2x8x1xf32>
    "tpu.trace_start"() <{level = 10 : i32, message = "brc,bcd->brd"}> : () -> ()
    %cst_26 = arith.constant dense<0.000000e+00> : vector<2x8x8xf32>
    %102 = tpu.matmul %99, %93, %cst_26 {dimension_numbers = #tpu.dot_dimension_numbers<[2], [1], [1], [2], [0, 0, 0, 1, 1, 2], [0], [0]>} : vector<2x8x8xf32>, vector<2x8x8xf32>, vector<2x8x8xf32> -> vector<2x8x8xf32>
    "tpu.trace_stop"() : () -> ()
    %cst_27 = arith.constant 1.000000e+00 : f32
    %103 = vector.broadcast %cst_27 : f32 to vector<2x8x1xf32>
    %104 = arith.divf %103, %101 : vector<2x8x1xf32>
    %105 = vector.broadcast %104 : vector<2x8x1xf32> to vector<2x8x8xf32>
    %106 = arith.mulf %102, %105 : vector<2x8x8xf32>
    %107 = vector.shape_cast %106 : vector<2x8x8xf32> to vector<16x8xf32>
    %108 = vector.extract_strided_slice %5 {offsets = [24, 0], sizes = [8, 32], strides = [1, 1]} : vector<32x32xf32> to vector<8x32xf32>
    %cst_28 = arith.constant dense<0.000000e+00> : vector<16x32xf32>
    %109 = tpu.matmul %107, %108, %cst_28 {dimension_numbers = #tpu.dot_dimension_numbers<[1], [0], [0], [1], [0, 0, 1, 1], [], []>} : vector<16x8xf32>, vector<8x32xf32>, vector<16x32xf32> -> vector<16x32xf32>
    %110 = arith.addf %87, %109 : vector<16x32xf32>
    %111 = vector.broadcast %9 : vector<1x32xf32> to vector<16x32xf32>
    %112 = arith.addf %110, %111 : vector<16x32xf32>
    %113 = arith.addf %3, %112 : vector<16x32xf32>
    %114 = vector.shape_cast %113 : vector<16x32xf32> to vector<2x8x32xf32>
    %cst_29 = arith.constant dense<0.000000e+00> : vector<2x32xf32>
    %115 = vector.multi_reduction <add>, %114, %cst_29 [1] : vector<2x8x32xf32> to vector<2x32xf32>
    %116 = vector.shape_cast %115 : vector<2x32xf32> to vector<2x1x32xf32>
    %cst_30 = arith.constant 8.000000e+00 : f32
    %117 = vector.broadcast %cst_30 : f32 to vector<2x1x32xf32>
    %118 = arith.divf %116, %117 : vector<2x1x32xf32>
    %119 = vector.broadcast %118 : vector<2x1x32xf32> to vector<2x8x32xf32>
    %120 = arith.subf %114, %119 : vector<2x8x32xf32>
    %121 = arith.mulf %120, %120 : vector<2x8x32xf32>
    %cst_31 = arith.constant dense<0.000000e+00> : vector<2x32xf32>
    %122 = vector.multi_reduction <add>, %121, %cst_31 [1] : vector<2x8x32xf32> to vector<2x32xf32>
    %123 = vector.shape_cast %122 : vector<2x32xf32> to vector<2x1x32xf32>
    %cst_32 = arith.constant 8.000000e+00 : f32
    %124 = vector.broadcast %cst_32 : f32 to vector<2x1x32xf32>
    %125 = arith.divf %123, %124 : vector<2x1x32xf32>
    %126 = vector.broadcast %118 : vector<2x1x32xf32> to vector<2x8x32xf32>
    %127 = arith.subf %114, %126 : vector<2x8x32xf32>
    %cst_33 = arith.constant 9.99999974E-6 : f32
    %128 = vector.broadcast %cst_33 : f32 to vector<2x1x32xf32>
    %129 = arith.addf %125, %128 : vector<2x1x32xf32>
    %130 = math.rsqrt %129 : vector<2x1x32xf32>
    %131 = vector.broadcast %130 : vector<2x1x32xf32> to vector<2x8x32xf32>
    %132 = arith.mulf %127, %131 : vector<2x8x32xf32>
    %133 = vector.shape_cast %132 : vector<2x8x32xf32> to vector<16x32xf32>
    %134 = vector.broadcast %10 : vector<1x32xf32> to vector<16x32xf32>
    %135 = arith.mulf %133, %134 : vector<16x32xf32>
    %136 = vector.broadcast %11 : vector<1x32xf32> to vector<16x32xf32>
    %137 = arith.addf %135, %136 : vector<16x32xf32>
    %cst_34 = arith.constant dense<0.000000e+00> : vector<16x64xf32>
    %138 = tpu.matmul %137, %6, %cst_34 {dimension_numbers = #tpu.dot_dimension_numbers<[1], [0], [0], [1], [0, 0, 1, 1], [], []>} : vector<16x32xf32>, vector<32x64xf32>, vector<16x64xf32> -> vector<16x64xf32>
    %139 = vector.broadcast %15 : vector<1x64xf32> to vector<16x64xf32>
    %140 = arith.addf %138, %139 : vector<16x64xf32>
    %cst_35 = arith.constant 0.000000e+00 : f32
    %141 = vector.broadcast %cst_35 : f32 to vector<16x64xf32>
    %142 = arith.maximumf %140, %141 : vector<16x64xf32>
    %cst_36 = arith.constant dense<0.000000e+00> : vector<16x32xf32>
    %143 = tpu.matmul %142, %7, %cst_36 {dimension_numbers = #tpu.dot_dimension_numbers<[1], [0], [0], [1], [0, 0, 1, 1], [], []>} : vector<16x64xf32>, vector<64x32xf32>, vector<16x32xf32> -> vector<16x32xf32>
    %144 = vector.broadcast %12 : vector<1x32xf32> to vector<16x32xf32>
    %145 = arith.addf %143, %144 : vector<16x32xf32>
    %146 = arith.addf %137, %145 : vector<16x32xf32>
    %147 = vector.shape_cast %146 : vector<16x32xf32> to vector<2x8x32xf32>
    %cst_37 = arith.constant dense<0.000000e+00> : vector<2x32xf32>
    %148 = vector.multi_reduction <add>, %147, %cst_37 [1] : vector<2x8x32xf32> to vector<2x32xf32>
    %149 = vector.shape_cast %148 : vector<2x32xf32> to vector<2x1x32xf32>
    %cst_38 = arith.constant 8.000000e+00 : f32
    %150 = vector.broadcast %cst_38 : f32 to vector<2x1x32xf32>
    %151 = arith.divf %149, %150 : vector<2x1x32xf32>
    %152 = vector.broadcast %151 : vector<2x1x32xf32> to vector<2x8x32xf32>
    %153 = arith.subf %147, %152 : vector<2x8x32xf32>
    %154 = arith.mulf %153, %153 : vector<2x8x32xf32>
    %cst_39 = arith.constant dense<0.000000e+00> : vector<2x32xf32>
    %155 = vector.multi_reduction <add>, %154, %cst_39 [1] : vector<2x8x32xf32> to vector<2x32xf32>
    %156 = vector.shape_cast %155 : vector<2x32xf32> to vector<2x1x32xf32>
    %cst_40 = arith.constant 8.000000e+00 : f32
    %157 = vector.broadcast %cst_40 : f32 to vector<2x1x32xf32>
    %158 = arith.divf %156, %157 : vector<2x1x32xf32>
    %159 = vector.broadcast %151 : vector<2x1x32xf32> to vector<2x8x32xf32>
    %160 = arith.subf %147, %159 : vector<2x8x32xf32>
    %cst_41 = arith.constant 9.99999974E-6 : f32
    %161 = vector.broadcast %cst_41 : f32 to vector<2x1x32xf32>
    %162 = arith.addf %158, %161 : vector<2x1x32xf32>
    %163 = math.rsqrt %162 : vector<2x1x32xf32>
    %164 = vector.broadcast %163 : vector<2x1x32xf32> to vector<2x8x32xf32>
    %165 = arith.mulf %160, %164 : vector<2x8x32xf32>
    %166 = vector.shape_cast %165 : vector<2x8x32xf32> to vector<16x32xf32>
    %167 = vector.broadcast %13 : vector<1x32xf32> to vector<16x32xf32>
    %168 = arith.mulf %166, %167 : vector<16x32xf32>
    %169 = vector.broadcast %14 : vector<1x32xf32> to vector<16x32xf32>
    %170 = arith.addf %168, %169 : vector<16x32xf32>
    %c0_42 = arith.constant 0 : index
    %c0_43 = arith.constant 0 : index
    %171 = vector.load %arg3[%c0_42, %c0_43] : memref<16x32xf32, #tpu.memory_space<vmem>>, vector<16x32xf32>
    tpu.vector_store %arg3[%c0_42, %c0_43], %170 {strides = array<i32>} : memref<16x32xf32, #tpu.memory_space<vmem>>, vector<16x32xf32>,
    return
  }
}

</mosaic_0001>

<llo_original>
// kernel: self_encoding_block.1
$region0: #{self_encoding_block.1}
  #allocation0 [shape = 'u32[]', space=smem, size = 0x4, offset = 0x4, fixed_abs, tag = 'smem constant byte address 0x4 - core index']
  #allocation1 [shape = 'u32[144,128]{1,0:T(1,128)}', space=vmem, size = 0x12000, scoped, tag = 'internal scratch']
  %s0 = inlined_call_operand.vmem [shape: f32[32,32], index: 0, kind: input, shape index: {}]
  %s1 = inlined_call_operand.vmem [shape: f32[32,192], index: 1, kind: input, shape index: {}]
  %s2 = inlined_call_operand.vmem [shape: f32[72,64], index: 2, kind: input, shape index: {}]
  %s3 = inlined_call_operand.hbm [shape: f32[16,32], index: 3, kind: output, shape index: {}]
  %s4 = sld [smem:[#allocation0]]
  $region22: #{self_encoding_block.1} parent=0
    _
  %s6 = ssub.s32 1, %s4
  %s7 = scalar_select 0, %s6, %s4
  $region1: #{self_encoding_block.1} parent=0
    #allocation2 [shape = 'u8[8192]{0}', space=vmem, size = 0x2000, scoped, tag = 'output window, operand 0, single buffered']
    #allocation3 [shape = 's32[1]{0}', space=sflag, size = 0x4, scoped, tag = 'scoped memory for self_encoding_block.1']
    %8 = vsyncpa [#allocation3], 0
    // Predicated region
    $region2: #{self_encoding_block.1} parent=1 // pred_check
      _
    $region3: #{self_encoding_block.1} parent=1 // pred_check_branch
      %10 = sbr.rel (0) target = $region5
    $region4: #{self_encoding_block.1} parent=1 // pred_region
      _
    $region5: #{self_encoding_block.1} parent=1 // pred_fallthru
      _
    // Predicated region
    $region6: #{self_encoding_block.1} parent=1 // pred_check
      _
    $region7: #{self_encoding_block.1} parent=1 // pred_check_branch
      %12 = sbr.rel (0) target = $region9
    $region8: #{self_encoding_block.1} parent=1 // pred_region
      _
    $region9: #{self_encoding_block.1} parent=1 // pred_fallthru
      _
    // Predicated region
    $region10: #{self_encoding_block.1} parent=1 // pred_check
      _
    $region11: #{self_encoding_block.1} parent=1 // pred_check_branch
      %14 = sbr.rel (0) target = $region13
    $region12: #{self_encoding_block.1} parent=1 // pred_region
      _
    $region13: #{self_encoding_block.1} parent=1 // pred_fallthru
      _
    %v15 = vld [vmem:[%s0] sm:$0xff]
    %v16 = vld [vmem:[%s0 + $0x8] sm:$0xff]
    %v17 = vld [vmem:[%s0 + $0x10] sm:$0xff]
    %v18 = vld [vmem:[%s0 + $0x18] sm:$0xff]
    %v19 = vld [vmem:[%s1] sm:$0xff]
    %v20 = vld [vmem:[%s1 + $0x8] sm:$0xff]
    %v21 = vld [vmem:[%s1 + $0x10] sm:$0xff]
    %v22 = vld [vmem:[%s1 + $0x18] sm:$0xff]
    %v23 = vld [vmem:[%s1 + $0x20] sm:$0xff]
    %v24 = vld [vmem:[%s1 + $0x28] sm:$0xff]
    %v25 = vld [vmem:[%s1 + $0x30] sm:$0xff]
    %v26 = vld [vmem:[%s1 + $0x38] sm:$0xff]
    %v27 = vld [vmem:[%s2] sm:$0xff]
    %v28 = vld [vmem:[%s2 + $0x8] sm:$0xff]
    %v29 = vld [vmem:[%s2 + $0x10] sm:$0xff]
    %v30 = vld [vmem:[%s2 + $0x18] sm:$0xff]
    %v31 = vld [vmem:[%s2 + $0x20] sm:$0xff]
    %v32 = vld [vmem:[%s2 + $0x28] sm:$0xff]
    %v33 = vld [vmem:[%s2 + $0x30] sm:$0xff]
    %v34 = vld [vmem:[%s2 + $0x38] sm:$0xff]
    %v35 = vld [vmem:[%s2 + $0x40] sm:$0xff]
    %vm36 = vcmask 261120
    %v38 = vsel %vm36, %v15, 0
    %v41 = vsel %vm36, %v16, 0
    %v44 = vsel %vm36, %v17, 0
    %v47 = vsel %vm36, %v18, 0
    %49 = vmatprep.subr.mxu0 0.0
    %50 = vmatpush1.msra.mxu0 %v19
    %51 = vmatprep.subr.mxu0 0.0
    %52 = vmatpush1.msra.mxu0 %v21
    %53 = vmatprep.subr.mxu0 0.0
    %54 = vmatpush1.msra.mxu0 %v23
    %55 = vmatprep.subr.mxu0 0.0
    %56 = vmatpush1.msra.mxu0 %v25
    %57 = vmatprep.subr.mxu0 0.0
    %58 = vmatpush1.msra.mxu0 0.0
    %59 = vmatprep.subr.mxu0 0.0
    %60 = vmatpush1.msra.mxu0 0.0
    %61 = vmatprep.subr.mxu0 0.0
    %62 = vmatpush1.msra.mxu0 0.0
    %63 = vmatprep.subr.mxu0 0.0
    %64 = vmatpush1.msra.mxu0 0.0
    %65 = vmatprep.subr.mxu0 0.0
    %66 = vmatpush1.msra.mxu0 0.0
    %67 = vmatprep.subr.mxu0 0.0
    %68 = vmatpush1.msra.mxu0 0.0
    %69 = vmatprep.subr.mxu0 0.0
    %70 = vmatpush1.msra.mxu0 0.0
    %71 = vmatprep.subr.mxu0 0.0
    %72 = vmatpush1.msra.mxu0 0.0
    %73 = vmatprep.subr.mxu0 0.0
    %74 = vmatpush1.msra.mxu0 0.0
    %75 = vmatprep.subr.mxu0 0.0
    %76 = vmatpush1.msra.mxu0 0.0
    %77 = vmatprep.subr.mxu0 0.0
    %78 = vmatpush1.msra.mxu0 0.0
    %79 = vmatprep.subr.mxu0 0.0
    %80 = vmatpush1.msra.mxu0 0.0
    %81 = vmatprep.subr.mxu0 0.0
    %82 = vmatpush1.msra.mxu0 0.0
    %83 = vmatprep.subr.mxu0 0.0
    %84 = vmatpush1.msra.mxu0 0.0
    %85 = vmatprep.subr.mxu0 0.0
    %86 = vmatpush1.msra.mxu0 0.0
    %87 = vmatprep.subr.mxu0 0.0
    %88 = vmatpush1.msra.mxu0 0.0
    %89 = vmatprep.subr.mxu0 0.0
    %90 = vmatpush1.msra.mxu0 0.0
    %91 = vmatprep.subr.mxu0 0.0
    %92 = vmatpush1.msra.mxu0 0.0
    %93 = vmatprep.subr.mxu0 0.0
    %94 = vmatpush1.msra.mxu0 0.0
    %95 = vmatprep.subr.mxu0 0.0
    %96 = vmatpush1.msra.mxu0 0.0
    %97 = vmatprep.subr.mxu0 0.0
    %98 = vmatpush1.msra.mxu0 0.0
    %99 = vmatprep.subr.mxu0 0.0
    %100 = vmatpush1.msra.mxu0 0.0
    %101 = vmatprep.subr.mxu0 0.0
    %102 = vmatpush1.msra.mxu0 0.0
    %103 = vmatprep.subr.mxu0 0.0
    %104 = vmatpush1.msra.mxu0 0.0
    %105 = vmatprep.subr.mxu0 0.0
    %106 = vmatpush1.msra.mxu0 0.0
    %107 = vmatprep.subr.mxu0 0.0
    %108 = vmatpush1.msra.mxu0 0.0
    %109 = vmatprep.subr.mxu0 0.0
    %110 = vmatpush1.msra.mxu0 0.0
    %111 = vmatprep.subr.mxu0 0.0
    %112 = vmatpush1.msra.mxu0 0.0
    %113 = vmatprep.mubr.f32.mxu0 0.0
    %114 = vmatmul.mubr.f32.gmra.mrb[0].mxu0 %v38
    %v115 = vpop.f32.mrb[0].mxu0
    %v116 = vadd.f32 0.0, %v115
    %v117 = vpop.f32.mrb[0].mxu0
    %118 = vmatprep.mubr.f32.mxu0 0.0
    %119 = vmatmul.mubr.f32.gmra.mrb[0].mxu0 %v41
    %v120 = vpop.f32.mrb[0].mxu0
    %v121 = vadd.f32 0.0, %v120
    %v122 = vpop.f32.mrb[0].mxu0
    %123 = vmatprep.mubr.f32.mxu0 0.0
    %124 = vmatmul.mubr.f32.gmra.mrb[0].mxu0 %v44
    %v125 = vpop.f32.mrb[0].mxu0
    %v126 = vadd.f32 0.0, %v125
    %v127 = vpop.f32.mrb[0].mxu0
    %128 = vmatprep.mubr.f32.mxu0 0.0
    %129 = vmatmul.mubr.f32.gmra.mrb[0].mxu0 %v47
    %v130 = vpop.f32.mrb[0].mxu0
    %v131 = vadd.f32 0.0, %v130
    %v132 = vpop.f32.mrb[0].mxu0
    %133 = vdwg.mxu0
    %135 = vrot.lane.b32.xlu0 %v126, 96
    %v136 = vpop.permute.xlu0 %135
    %vm137 = vcmask 64512
    %v139 = vsel %vm137, %v116, 0
    %v141 = vsel %vm137, %v136, 0
    %143 = vmatprep.subr.mxu0 0.0
    %144 = vmatpush1.xpose.msra.mxu0 %v141
    %145 = vmatprep.subr.mxu0 0.0
    %146 = vmatpush1.xpose.msra.mxu0 0.0
    %147 = vmatprep.subr.mxu0 0.0
    %148 = vmatpush1.xpose.msra.mxu0 0.0
    %149 = vmatprep.subr.mxu0 0.0
    %150 = vmatpush1.xpose.msra.mxu0 0.0
    %151 = vmatprep.subr.mxu0 0.0
    %152 = vmatpush1.xpose.msra.mxu0 0.0
    %153 = vmatprep.subr.mxu0 0.0
    %154 = vmatpush1.xpose.msra.mxu0 0.0
    %155 = vmatprep.subr.mxu0 0.0
    %156 = vmatpush1.xpose.msra.mxu0 0.0
    %157 = vmatprep.subr.mxu0 0.0
    %158 = vmatpush1.xpose.msra.mxu0 0.0
    %159 = vmatprep.subr.mxu0 0.0
    %160 = vmatpush1.xpose.msra.mxu0 0.0
    %161 = vmatprep.subr.mxu0 0.0
    %162 = vmatpush1.xpose.msra.mxu0 0.0
    %163 = vmatprep.subr.mxu0 0.0
    %164 = vmatpush1.xpose.msra.mxu0 0.0
    %165 = vmatprep.subr.mxu0 0.0
    %166 = vmatpush1.xpose.msra.mxu0 0.0
    %167 = vmatprep.subr.mxu0 0.0
    %168 = vmatpush1.xpose.msra.mxu0 0.0
    %169 = vmatprep.subr.mxu0 0.0
    %170 = vmatpush1.xpose.msra.mxu0 0.0
    %171 = vmatprep.subr.mxu0 0.0
    %172 = vmatpush1.xpose.msra.mxu0 0.0
    %173 = vmatprep.subr.mxu0 0.0
    %174 = vmatpush1.xpose.msra.mxu0 0.0
    %175 = vmatprep.subr.mxu0 0.0
    %176 = vmatpush1.xpose.msra.mxu0 0.0
    %177 = vmatprep.subr.mxu0 0.0
    %178 = vmatpush1.xpose.msra.mxu0 0.0
    %179 = vmatprep.subr.mxu0 0.0
    %180 = vmatpush1.xpose.msra.mxu0 0.0
    %181 = vmatprep.subr.mxu0 0.0
    %182 = vmatpush1.xpose.msra.mxu0 0.0
    %183 = vmatprep.subr.mxu0 0.0
    %184 = vmatpush1.xpose.msra.mxu0 0.0
    %185 = vmatprep.subr.mxu0 0.0
    %186 = vmatpush1.xpose.msra.mxu0 0.0
    %187 = vmatprep.subr.mxu0 0.0
    %188 = vmatpush1.xpose.msra.mxu0 0.0
    %189 = vmatprep.subr.mxu0 0.0
    %190 = vmatpush1.xpose.msra.mxu0 0.0
    %191 = vmatprep.subr.mxu0 0.0
    %192 = vmatpush1.xpose.msra.mxu0 0.0
    %193 = vmatprep.subr.mxu0 0.0
    %194 = vmatpush1.xpose.msra.mxu0 0.0
    %195 = vmatprep.subr.mxu0 0.0
    %196 = vmatpush1.xpose.msra.mxu0 0.0
    %197 = vmatprep.subr.mxu0 0.0
    %198 = vmatpush1.xpose.msra.mxu0 0.0
    %199 = vmatprep.subr.mxu0 0.0
    %200 = vmatpush1.xpose.msra.mxu0 0.0
    %201 = vmatprep.subr.mxu0 0.0
    %202 = vmatpush1.xpose.msra.mxu0 0.0
    %203 = vmatprep.subr.mxu0 0.0
    %204 = vmatpush1.xpose.msra.mxu0 0.0
    %205 = vmatprep.subr.mxu0 0.0
    %206 = vmatpush1.xpose.msra.mxu0 0.0
    %207 = vmatprep.mubr.f32.mxu0 0.0
    %208 = vmatmul.mubr.f32.gmra.mrb[0].mxu0 %v139
    %v209 = vpop.f32.mrb[0].mxu0
    %v210 = vadd.f32 0.0, %v209
    %v211 = vpop.f32.mrb[0].mxu0
    %212 = vdwg.mxu0
    %214 = vrot.lane.b32.xlu0 %v131, 96
    %v215 = vpop.permute.xlu0 %214
    %v217 = vsel %vm137, %v121, 0
    %v219 = vsel %vm137, %v215, 0
    %221 = vmatprep.subr.mxu0 0.0
    %222 = vmatpush1.xpose.msra.mxu0 %v219
    %223 = vmatprep.subr.mxu0 0.0
    %224 = vmatpush1.xpose.msra.mxu0 0.0
    %225 = vmatprep.subr.mxu0 0.0
    %226 = vmatpush1.xpose.msra.mxu0 0.0
    %227 = vmatprep.subr.mxu0 0.0
    %228 = vmatpush1.xpose.msra.mxu0 0.0
    %229 = vmatprep.subr.mxu0 0.0
    %230 = vmatpush1.xpose.msra.mxu0 0.0
    %231 = vmatprep.subr.mxu0 0.0
    %232 = vmatpush1.xpose.msra.mxu0 0.0
    %233 = vmatprep.subr.mxu0 0.0
    %234 = vmatpush1.xpose.msra.mxu0 0.0
    %235 = vmatprep.subr.mxu0 0.0
    %236 = vmatpush1.xpose.msra.mxu0 0.0
    %237 = vmatprep.subr.mxu0 0.0
    %238 = vmatpush1.xpose.msra.mxu0 0.0
    %239 = vmatprep.subr.mxu0 0.0
    %240 = vmatpush1.xpose.msra.mxu0 0.0
    %241 = vmatprep.subr.mxu0 0.0
    %242 = vmatpush1.xpose.msra.mxu0 0.0
    %243 = vmatprep.subr.mxu0 0.0
    %244 = vmatpush1.xpose.msra.mxu0 0.0
    %245 = vmatprep.subr.mxu0 0.0
    %246 = vmatpush1.xpose.msra.mxu0 0.0
    %247 = vmatprep.subr.mxu0 0.0
    %248 = vmatpush1.xpose.msra.mxu0 0.0
    %249 = vmatprep.subr.mxu0 0.0
    %250 = vmatpush1.xpose.msra.mxu0 0.0
    %251 = vmatprep.subr.mxu0 0.0
    %252 = vmatpush1.xpose.msra.mxu0 0.0
    %253 = vmatprep.subr.mxu0 0.0
    %254 = vmatpush1.xpose.msra.mxu0 0.0
    %255 = vmatprep.subr.mxu0 0.0
    %256 = vmatpush1.xpose.msra.mxu0 0.0
    %257 = vmatprep.subr.mxu0 0.0
    %258 = vmatpush1.xpose.msra.mxu0 0.0
    %259 = vmatprep.subr.mxu0 0.0
    %260 = vmatpush1.xpose.msra.mxu0 0.0
    %261 = vmatprep.subr.mxu0 0.0
    %262 = vmatpush1.xpose.msra.mxu0 0.0
    %263 = vmatprep.subr.mxu0 0.0
    %264 = vmatpush1.xpose.msra.mxu0 0.0
    %265 = vmatprep.subr.mxu0 0.0
    %266 = vmatpush1.xpose.msra.mxu0 0.0
    %267 = vmatprep.subr.mxu0 0.0
    %268 = vmatpush1.xpose.msra.mxu0 0.0
    %269 = vmatprep.subr.mxu0 0.0
    %270 = vmatpush1.xpose.msra.mxu0 0.0
    %271 = vmatprep.subr.mxu0 0.0
    %272 = vmatpush1.xpose.msra.mxu0 0.0
    %273 = vmatprep.subr.mxu0 0.0
    %274 = vmatpush1.xpose.msra.mxu0 0.0
    %275 = vmatprep.subr.mxu0 0.0
    %276 = vmatpush1.xpose.msra.mxu0 0.0
    %277 = vmatprep.subr.mxu0 0.0
    %278 = vmatpush1.xpose.msra.mxu0 0.0
    %279 = vmatprep.subr.mxu0 0.0
    %280 = vmatpush1.xpose.msra.mxu0 0.0
    %281 = vmatprep.subr.mxu0 0.0
    %282 = vmatpush1.xpose.msra.mxu0 0.0
    %283 = vmatprep.subr.mxu0 0.0
    %284 = vmatpush1.xpose.msra.mxu0 0.0
    %285 = vmatprep.mubr.f32.mxu0 0.0
    %286 = vmatmul.mubr.f32.gmra.mrb[0].mxu0 %v217
    %v287 = vpop.f32.mrb[0].mxu0
    %v288 = vadd.f32 0.0, %v287
    %v289 = vpop.f32.mrb[0].mxu0
    %290 = vdwg.mxu0
    %v291 = vsel %vm137, %v210, -inf
    %292 = vmax.xlane.f32.xlu0 %v291
    %v293 = vpop.xlane.xlu0 %292
    %v294 = vsel %vm137, %v288, -inf
    %295 = vmax.xlane.f32.xlu0 %v294
    %v296 = vpop.xlane.xlu0 %295
    %v297 = vsub.f32 %v210, %v293
    %v298 = vsub.f32 %v288, %v296
    %v299 = vmul.f32 %v297, 1.442695
    %v300 = vpow.pop %v299
    %v301 = vmul.f32 %v298, 1.442695
    %v302 = vpow.pop %v301
    %v303 = vsel %vm137, %v300, 0.0
    %304 = vadd.xlane.f32.xlu0 %v303
    %v305 = vpop.xlane.xlu0 %304
    %v306 = vsel %vm137, %v302, 0.0
    %307 = vadd.xlane.f32.xlu0 %v306
    %v308 = vpop.xlane.xlu0 %307
    %309 = vrot.lane.b32.xlu0 %v126, 64
    %v310 = vpop.permute.xlu0 %309
    %v313 = vsel %vm137, %v300, 0
    %315 = vmatprep.subr.mxu0 0.0
    %316 = vmatpush1.msra.mxu0 %v310
    %317 = vmatprep.subr.mxu0 0.0
    %318 = vmatpush1.msra.mxu0 0.0
    %319 = vmatprep.subr.mxu0 0.0
    %320 = vmatpush1.msra.mxu0 0.0
    %321 = vmatprep.subr.mxu0 0.0
    %322 = vmatpush1.msra.mxu0 0.0
    %323 = vmatprep.subr.mxu0 0.0
    %324 = vmatpush1.msra.mxu0 0.0
    %325 = vmatprep.subr.mxu0 0.0
    %326 = vmatpush1.msra.mxu0 0.0
    %327 = vmatprep.subr.mxu0 0.0
    %328 = vmatpush1.msra.mxu0 0.0
    %329 = vmatprep.subr.mxu0 0.0
    %330 = vmatpush1.msra.mxu0 0.0
    %331 = vmatprep.subr.mxu0 0.0
    %332 = vmatpush1.msra.mxu0 0.0
    %333 = vmatprep.subr.mxu0 0.0
    %334 = vmatpush1.msra.mxu0 0.0
    %335 = vmatprep.subr.mxu0 0.0
    %336 = vmatpush1.msra.mxu0 0.0
    %337 = vmatprep.subr.mxu0 0.0
    %338 = vmatpush1.msra.mxu0 0.0
    %339 = vmatprep.subr.mxu0 0.0
    %340 = vmatpush1.msra.mxu0 0.0
    %341 = vmatprep.subr.mxu0 0.0
    %342 = vmatpush1.msra.mxu0 0.0
    %343 = vmatprep.subr.mxu0 0.0
    %344 = vmatpush1.msra.mxu0 0.0
    %345 = vmatprep.subr.mxu0 0.0
    %346 = vmatpush1.msra.mxu0 0.0
    %347 = vmatprep.subr.mxu0 0.0
    %348 = vmatpush1.msra.mxu0 0.0
    %349 = vmatprep.subr.mxu0 0.0
    %350 = vmatpush1.msra.mxu0 0.0
    %351 = vmatprep.subr.mxu0 0.0
    %352 = vmatpush1.msra.mxu0 0.0
    %353 = vmatprep.subr.mxu0 0.0
    %354 = vmatpush1.msra.mxu0 0.0
    %355 = vmatprep.subr.mxu0 0.0
    %356 = vmatpush1.msra.mxu0 0.0
    %357 = vmatprep.subr.mxu0 0.0
    %358 = vmatpush1.msra.mxu0 0.0
    %359 = vmatprep.subr.mxu0 0.0
    %360 = vmatpush1.msra.mxu0 0.0
    %361 = vmatprep.subr.mxu0 0.0
    %362 = vmatpush1.msra.mxu0 0.0
    %363 = vmatprep.subr.mxu0 0.0
    %364 = vmatpush1.msra.mxu0 0.0
    %365 = vmatprep.subr.mxu0 0.0
    %366 = vmatpush1.msra.mxu0 0.0
    %367 = vmatprep.subr.mxu0 0.0
    %368 = vmatpush1.msra.mxu0 0.0
    %369 = vmatprep.subr.mxu0 0.0
    %370 = vmatpush1.msra.mxu0 0.0
    %371 = vmatprep.subr.mxu0 0.0
    %372 = vmatpush1.msra.mxu0 0.0
    %373 = vmatprep.subr.mxu0 0.0
    %374 = vmatpush1.msra.mxu0 0.0
    %375 = vmatprep.subr.mxu0 0.0
    %376 = vmatpush1.msra.mxu0 0.0
    %377 = vmatprep.subr.mxu0 0.0
    %378 = vmatpush1.msra.mxu0 0.0
    %379 = vmatprep.mubr.f32.mxu0 0.0
    %380 = vmatmul.mubr.f32.gmra.mrb[0].mxu0 %v313
    %v381 = vpop.f32.mrb[0].mxu0
    %v382 = vadd.f32 0.0, %v381
    %v383 = vpop.f32.mrb[0].mxu0
    %384 = vdwg.mxu0
    %385 = vrot.lane.b32.xlu0 %v131, 64
    %v386 = vpop.permute.xlu0 %385
    %v389 = vsel %vm137, %v302, 0
    %391 = vmatprep.subr.mxu0 0.0
    %392 = vmatpush1.msra.mxu0 %v386
    %393 = vmatprep.subr.mxu0 0.0
    %394 = vmatpush1.msra.mxu0 0.0
    %395 = vmatprep.subr.mxu0 0.0
    %396 = vmatpush1.msra.mxu0 0.0
    %397 = vmatprep.subr.mxu0 0.0
    %398 = vmatpush1.msra.mxu0 0.0
    %399 = vmatprep.subr.mxu0 0.0
    %400 = vmatpush1.msra.mxu0 0.0
    %401 = vmatprep.subr.mxu0 0.0
    %402 = vmatpush1.msra.mxu0 0.0
    %403 = vmatprep.subr.mxu0 0.0
    %404 = vmatpush1.msra.mxu0 0.0
    %405 = vmatprep.subr.mxu0 0.0
    %406 = vmatpush1.msra.mxu0 0.0
    %407 = vmatprep.subr.mxu0 0.0
    %408 = vmatpush1.msra.mxu0 0.0
    %409 = vmatprep.subr.mxu0 0.0
    %410 = vmatpush1.msra.mxu0 0.0
    %411 = vmatprep.subr.mxu0 0.0
    %412 = vmatpush1.msra.mxu0 0.0
    %413 = vmatprep.subr.mxu0 0.0
    %414 = vmatpush1.msra.mxu0 0.0
    %415 = vmatprep.subr.mxu0 0.0
    %416 = vmatpush1.msra.mxu0 0.0
    %417 = vmatprep.subr.mxu0 0.0
    %418 = vmatpush1.msra.mxu0 0.0
    %419 = vmatprep.subr.mxu0 0.0
    %420 = vmatpush1.msra.mxu0 0.0
    %421 = vmatprep.subr.mxu0 0.0
    %422 = vmatpush1.msra.mxu0 0.0
    %423 = vmatprep.subr.mxu0 0.0
    %424 = vmatpush1.msra.mxu0 0.0
    %425 = vmatprep.subr.mxu0 0.0
    %426 = vmatpush1.msra.mxu0 0.0
    %427 = vmatprep.subr.mxu0 0.0
    %428 = vmatpush1.msra.mxu0 0.0
    %429 = vmatprep.subr.mxu0 0.0
    %430 = vmatpush1.msra.mxu0 0.0
    %431 = vmatprep.subr.mxu0 0.0
    %432 = vmatpush1.msra.mxu0 0.0
    %433 = vmatprep.subr.mxu0 0.0
    %434 = vmatpush1.msra.mxu0 0.0
    %435 = vmatprep.subr.mxu0 0.0
    %436 = vmatpush1.msra.mxu0 0.0
    %437 = vmatprep.subr.mxu0 0.0
    %438 = vmatpush1.msra.mxu0 0.0
    %439 = vmatprep.subr.mxu0 0.0
    %440 = vmatpush1.msra.mxu0 0.0
    %441 = vmatprep.subr.mxu0 0.0
    %442 = vmatpush1.msra.mxu0 0.0
    %443 = vmatprep.subr.mxu0 0.0
    %444 = vmatpush1.msra.mxu0 0.0
    %445 = vmatprep.subr.mxu0 0.0
    %446 = vmatpush1.msra.mxu0 0.0
    %447 = vmatprep.subr.mxu0 0.0
    %448 = vmatpush1.msra.mxu0 0.0
    %449 = vmatprep.subr.mxu0 0.0
    %450 = vmatpush1.msra.mxu0 0.0
    %451 = vmatprep.subr.mxu0 0.0
    %452 = vmatpush1.msra.mxu0 0.0
    %453 = vmatprep.subr.mxu0 0.0
    %454 = vmatpush1.msra.mxu0 0.0
    %455 = vmatprep.mubr.f32.mxu0 0.0
    %456 = vmatmul.mubr.f32.gmra.mrb[0].mxu0 %v389
    %v457 = vpop.f32.mrb[0].mxu0
    %v458 = vadd.f32 0.0, %v457
    %v459 = vpop.f32.mrb[0].mxu0
    %460 = vdwg.mxu0
    %v461 = vrcp.pop %v305
    %v462 = vmul.f32 1.0, %v461
    %v463 = vrcp.pop %v308
    %v464 = vmul.f32 1.0, %v463
    %v465 = vmul.f32 %v382, %v462
    %v466 = vmul.f32 %v458, %v464
    %467 = vrot.lane.b32.xlu0 %v116, 120
    %v468 = vpop.permute.xlu0 %467
    %469 = vrot.lane.b32.xlu0 %v126, 88
    %v470 = vpop.permute.xlu0 %469
    %v471 = vsel %vm137, %v468, 0
    %v473 = vsel %vm137, %v470, 0
    %475 = vmatprep.subr.mxu0 0.0
    %476 = vmatpush1.xpose.msra.mxu0 %v473
    %477 = vmatprep.subr.mxu0 0.0
    %478 = vmatpush1.xpose.msra.mxu0 0.0
    %479 = vmatprep.subr.mxu0 0.0
    %480 = vmatpush1.xpose.msra.mxu0 0.0
    %481 = vmatprep.subr.mxu0 0.0
    %482 = vmatpush1.xpose.msra.mxu0 0.0
    %483 = vmatprep.subr.mxu0 0.0
    %484 = vmatpush1.xpose.msra.mxu0 0.0
    %485 = vmatprep.subr.mxu0 0.0
    %486 = vmatpush1.xpose.msra.mxu0 0.0
    %487 = vmatprep.subr.mxu0 0.0
    %488 = vmatpush1.xpose.msra.mxu0 0.0
    %489 = vmatprep.subr.mxu0 0.0
    %490 = vmatpush1.xpose.msra.mxu0 0.0
    %491 = vmatprep.subr.mxu0 0.0
    %492 = vmatpush1.xpose.msra.mxu0 0.0
    %493 = vmatprep.subr.mxu0 0.0
    %494 = vmatpush1.xpose.msra.mxu0 0.0
    %495 = vmatprep.subr.mxu0 0.0
    %496 = vmatpush1.xpose.msra.mxu0 0.0
    %497 = vmatprep.subr.mxu0 0.0
    %498 = vmatpush1.xpose.msra.mxu0 0.0
    %499 = vmatprep.subr.mxu0 0.0
    %500 = vmatpush1.xpose.msra.mxu0 0.0
    %501 = vmatprep.subr.mxu0 0.0
    %502 = vmatpush1.xpose.msra.mxu0 0.0
    %503 = vmatprep.subr.mxu0 0.0
    %504 = vmatpush1.xpose.msra.mxu0 0.0
    %505 = vmatprep.subr.mxu0 0.0
    %506 = vmatpush1.xpose.msra.mxu0 0.0
    %507 = vmatprep.subr.mxu0 0.0
    %508 = vmatpush1.xpose.msra.mxu0 0.0
    %509 = vmatprep.subr.mxu0 0.0
    %510 = vmatpush1.xpose.msra.mxu0 0.0
    %511 = vmatprep.subr.mxu0 0.0
    %512 = vmatpush1.xpose.msra.mxu0 0.0
    %513 = vmatprep.subr.mxu0 0.0
    %514 = vmatpush1.xpose.msra.mxu0 0.0
    %515 = vmatprep.subr.mxu0 0.0
    %516 = vmatpush1.xpose.msra.mxu0 0.0
    %517 = vmatprep.subr.mxu0 0.0
    %518 = vmatpush1.xpose.msra.mxu0 0.0
    %519 = vmatprep.subr.mxu0 0.0
    %520 = vmatpush1.xpose.msra.mxu0 0.0
    %521 = vmatprep.subr.mxu0 0.0
    %522 = vmatpush1.xpose.msra.mxu0 0.0
    %523 = vmatprep.subr.mxu0 0.0
    %524 = vmatpush1.xpose.msra.mxu0 0.0
    %525 = vmatprep.subr.mxu0 0.0
    %526 = vmatpush1.xpose.msra.mxu0 0.0
    %527 = vmatprep.subr.mxu0 0.0
    %528 = vmatpush1.xpose.msra.mxu0 0.0
    %529 = vmatprep.subr.mxu0 0.0
    %530 = vmatpush1.xpose.msra.mxu0 0.0
    %531 = vmatprep.subr.mxu0 0.0
    %532 = vmatpush1.xpose.msra.mxu0 0.0
    %533 = vmatprep.subr.mxu0 0.0
    %534 = vmatpush1.xpose.msra.mxu0 0.0
    %535 = vmatprep.subr.mxu0 0.0
    %536 = vmatpush1.xpose.msra.mxu0 0.0
    %537 = vmatprep.subr.mxu0 0.0
    %538 = vmatpush1.xpose.msra.mxu0 0.0
    %539 = vmatprep.mubr.f32.mxu0 0.0
    %540 = vmatmul.mubr.f32.gmra.mrb[0].mxu0 %v471
    %v541 = vpop.f32.mrb[0].mxu0
    %v542 = vadd.f32 0.0, %v541
    %v543 = vpop.f32.mrb[0].mxu0
    %544 = vdwg.mxu0
    %545 = vrot.lane.b32.xlu0 %v121, 120
    %v546 = vpop.permute.xlu0 %545
    %547 = vrot.lane.b32.xlu0 %v131, 88
    %v548 = vpop.permute.xlu0 %547
    %v549 = vsel %vm137, %v546, 0
    %v551 = vsel %vm137, %v548, 0
    %553 = vmatprep.subr.mxu0 0.0
    %554 = vmatpush1.xpose.msra.mxu0 %v551
    %555 = vmatprep.subr.mxu0 0.0
    %556 = vmatpush1.xpose.msra.mxu0 0.0
    %557 = vmatprep.subr.mxu0 0.0
    %558 = vmatpush1.xpose.msra.mxu0 0.0
    %559 = vmatprep.subr.mxu0 0.0
    %560 = vmatpush1.xpose.msra.mxu0 0.0
    %561 = vmatprep.subr.mxu0 0.0
    %562 = vmatpush1.xpose.msra.mxu0 0.0
    %563 = vmatprep.subr.mxu0 0.0
    %564 = vmatpush1.xpose.msra.mxu0 0.0
    %565 = vmatprep.subr.mxu0 0.0
    %566 = vmatpush1.xpose.msra.mxu0 0.0
    %567 = vmatprep.subr.mxu0 0.0
    %568 = vmatpush1.xpose.msra.mxu0 0.0
    %569 = vmatprep.subr.mxu0 0.0
    %570 = vmatpush1.xpose.msra.mxu0 0.0
    %571 = vmatprep.subr.mxu0 0.0
    %572 = vmatpush1.xpose.msra.mxu0 0.0
    %573 = vmatprep.subr.mxu0 0.0
    %574 = vmatpush1.xpose.msra.mxu0 0.0
    %575 = vmatprep.subr.mxu0 0.0
    %576 = vmatpush1.xpose.msra.mxu0 0.0
    %577 = vmatprep.subr.mxu0 0.0
    %578 = vmatpush1.xpose.msra.mxu0 0.0
    %579 = vmatprep.subr.mxu0 0.0
    %580 = vmatpush1.xpose.msra.mxu0 0.0
    %581 = vmatprep.subr.mxu0 0.0
    %582 = vmatpush1.xpose.msra.mxu0 0.0
    %583 = vmatprep.subr.mxu0 0.0
    %584 = vmatpush1.xpose.msra.mxu0 0.0
    %585 = vmatprep.subr.mxu0 0.0
    %586 = vmatpush1.xpose.msra.mxu0 0.0
    %587 = vmatprep.subr.mxu0 0.0
    %588 = vmatpush1.xpose.msra.mxu0 0.0
    %589 = vmatprep.subr.mxu0 0.0
    %590 = vmatpush1.xpose.msra.mxu0 0.0
    %591 = vmatprep.subr.mxu0 0.0
    %592 = vmatpush1.xpose.msra.mxu0 0.0
    %593 = vmatprep.subr.mxu0 0.0
    %594 = vmatpush1.xpose.msra.mxu0 0.0
    %595 = vmatprep.subr.mxu0 0.0
    %596 = vmatpush1.xpose.msra.mxu0 0.0
    %597 = vmatprep.subr.mxu0 0.0
    %598 = vmatpush1.xpose.msra.mxu0 0.0
    %599 = vmatprep.subr.mxu0 0.0
    %600 = vmatpush1.xpose.msra.mxu0 0.0
    %601 = vmatprep.subr.mxu0 0.0
    %602 = vmatpush1.xpose.msra.mxu0 0.0
    %603 = vmatprep.subr.mxu0 0.0
    %604 = vmatpush1.xpose.msra.mxu0 0.0
    %605 = vmatprep.subr.mxu0 0.0
    %606 = vmatpush1.xpose.msra.mxu0 0.0
    %607 = vmatprep.subr.mxu0 0.0
    %608 = vmatpush1.xpose.msra.mxu0 0.0
    %609 = vmatprep.subr.mxu0 0.0
    %610 = vmatpush1.xpose.msra.mxu0 0.0
    %611 = vmatprep.subr.mxu0 0.0
    %612 = vmatpush1.xpose.msra.mxu0 0.0
    %613 = vmatprep.subr.mxu0 0.0
    %614 = vmatpush1.xpose.msra.mxu0 0.0
    %615 = vmatprep.subr.mxu0 0.0
    %616 = vmatpush1.xpose.msra.mxu0 0.0
    %617 = vmatprep.mubr.f32.mxu0 0.0
    %618 = vmatmul.mubr.f32.gmra.mrb[0].mxu0 %v549
    %v619 = vpop.f32.mrb[0].mxu0
    %v620 = vadd.f32 0.0, %v619
    %v621 = vpop.f32.mrb[0].mxu0
    %622 = vdwg.mxu0
    %v623 = vsel %vm137, %v542, -inf
    %624 = vmax.xlane.f32.xlu0 %v623
    %v625 = vpop.xlane.xlu0 %624
    %v626 = vsel %vm137, %v620, -inf
    %627 = vmax.xlane.f32.xlu0 %v626
    %v628 = vpop.xlane.xlu0 %627
    %v629 = vsub.f32 %v542, %v625
    %v630 = vsub.f32 %v620, %v628
    %v631 = vmul.f32 %v629, 1.442695
    %v632 = vpow.pop %v631
    %v633 = vmul.f32 %v630, 1.442695
    %v634 = vpow.pop %v633
    %v635 = vsel %vm137, %v632, 0.0
    %636 = vadd.xlane.f32.xlu0 %v635
    %v637 = vpop.xlane.xlu0 %636
    %v638 = vsel %vm137, %v634, 0.0
    %639 = vadd.xlane.f32.xlu0 %v638
    %v640 = vpop.xlane.xlu0 %639
    %641 = vrot.lane.b32.xlu0 %v126, 56
    %v642 = vpop.permute.xlu0 %641
    %v645 = vsel %vm137, %v632, 0
    %647 = vmatprep.subr.mxu0 0.0
    %648 = vmatpush1.msra.mxu0 %v642
    %649 = vmatprep.subr.mxu0 0.0
    %650 = vmatpush1.msra.mxu0 0.0
    %651 = vmatprep.subr.mxu0 0.0
    %652 = vmatpush1.msra.mxu0 0.0
    %653 = vmatprep.subr.mxu0 0.0
    %654 = vmatpush1.msra.mxu0 0.0
    %655 = vmatprep.subr.mxu0 0.0
    %656 = vmatpush1.msra.mxu0 0.0
    %657 = vmatprep.subr.mxu0 0.0
    %658 = vmatpush1.msra.mxu0 0.0
    %659 = vmatprep.subr.mxu0 0.0
    %660 = vmatpush1.msra.mxu0 0.0
    %661 = vmatprep.subr.mxu0 0.0
    %662 = vmatpush1.msra.mxu0 0.0
    %663 = vmatprep.subr.mxu0 0.0
    %664 = vmatpush1.msra.mxu0 0.0
    %665 = vmatprep.subr.mxu0 0.0
    %666 = vmatpush1.msra.mxu0 0.0
    %667 = vmatprep.subr.mxu0 0.0
    %668 = vmatpush1.msra.mxu0 0.0
    %669 = vmatprep.subr.mxu0 0.0
    %670 = vmatpush1.msra.mxu0 0.0
    %671 = vmatprep.subr.mxu0 0.0
    %672 = vmatpush1.msra.mxu0 0.0
    %673 = vmatprep.subr.mxu0 0.0
    %674 = vmatpush1.msra.mxu0 0.0
    %675 = vmatprep.subr.mxu0 0.0
    %676 = vmatpush1.msra.mxu0 0.0
    %677 = vmatprep.subr.mxu0 0.0
    %678 = vmatpush1.msra.mxu0 0.0
    %679 = vmatprep.subr.mxu0 0.0
    %680 = vmatpush1.msra.mxu0 0.0
    %681 = vmatprep.subr.mxu0 0.0
    %682 = vmatpush1.msra.mxu0 0.0
    %683 = vmatprep.subr.mxu0 0.0
    %684 = vmatpush1.msra.mxu0 0.0
    %685 = vmatprep.subr.mxu0 0.0
    %686 = vmatpush1.msra.mxu0 0.0
    %687 = vmatprep.subr.mxu0 0.0
    %688 = vmatpush1.msra.mxu0 0.0
    %689 = vmatprep.subr.mxu0 0.0
    %690 = vmatpush1.msra.mxu0 0.0
    %691 = vmatprep.subr.mxu0 0.0
    %692 = vmatpush1.msra.mxu0 0.0
    %693 = vmatprep.subr.mxu0 0.0
    %694 = vmatpush1.msra.mxu0 0.0
    %695 = vmatprep.subr.mxu0 0.0
    %696 = vmatpush1.msra.mxu0 0.0
    %697 = vmatprep.subr.mxu0 0.0
    %698 = vmatpush1.msra.mxu0 0.0
    %699 = vmatprep.subr.mxu0 0.0
    %700 = vmatpush1.msra.mxu0 0.0
    %701 = vmatprep.subr.mxu0 0.0
    %702 = vmatpush1.msra.mxu0 0.0
    %703 = vmatprep.subr.mxu0 0.0
    %704 = vmatpush1.msra.mxu0 0.0
    %705 = vmatprep.subr.mxu0 0.0
    %706 = vmatpush1.msra.mxu0 0.0
    %707 = vmatprep.subr.mxu0 0.0
    %708 = vmatpush1.msra.mxu0 0.0
    %709 = vmatprep.subr.mxu0 0.0
    %710 = vmatpush1.msra.mxu0 0.0
    %711 = vmatprep.mubr.f32.mxu0 0.0
    %712 = vmatmul.mubr.f32.gmra.mrb[0].mxu0 %v645
    %v713 = vpop.f32.mrb[0].mxu0
    %v714 = vadd.f32 0.0, %v713
    %v715 = vpop.f32.mrb[0].mxu0
    %716 = vdwg.mxu0
    %717 = vrot.lane.b32.xlu0 %v131, 56
    %v718 = vpop.permute.xlu0 %717
    %v721 = vsel %vm137, %v634, 0
    %723 = vmatprep.subr.mxu0 0.0
    %724 = vmatpush1.msra.mxu0 %v718
    %725 = vmatprep.subr.mxu0 0.0
    %726 = vmatpush1.msra.mxu0 0.0
    %727 = vmatprep.subr.mxu0 0.0
    %728 = vmatpush1.msra.mxu0 0.0
    %729 = vmatprep.subr.mxu0 0.0
    %730 = vmatpush1.msra.mxu0 0.0
    %731 = vmatprep.subr.mxu0 0.0
    %732 = vmatpush1.msra.mxu0 0.0
    %733 = vmatprep.subr.mxu0 0.0
    %734 = vmatpush1.msra.mxu0 0.0
    %735 = vmatprep.subr.mxu0 0.0
    %736 = vmatpush1.msra.mxu0 0.0
    %737 = vmatprep.subr.mxu0 0.0
    %738 = vmatpush1.msra.mxu0 0.0
    %739 = vmatprep.subr.mxu0 0.0
    %740 = vmatpush1.msra.mxu0 0.0
    %741 = vmatprep.subr.mxu0 0.0
    %742 = vmatpush1.msra.mxu0 0.0
    %743 = vmatprep.subr.mxu0 0.0
    %744 = vmatpush1.msra.mxu0 0.0
    %745 = vmatprep.subr.mxu0 0.0
    %746 = vmatpush1.msra.mxu0 0.0
    %747 = vmatprep.subr.mxu0 0.0
    %748 = vmatpush1.msra.mxu0 0.0
    %749 = vmatprep.subr.mxu0 0.0
    %750 = vmatpush1.msra.mxu0 0.0
    %751 = vmatprep.subr.mxu0 0.0
    %752 = vmatpush1.msra.mxu0 0.0
    %753 = vmatprep.subr.mxu0 0.0
    %754 = vmatpush1.msra.mxu0 0.0
    %755 = vmatprep.subr.mxu0 0.0
    %756 = vmatpush1.msra.mxu0 0.0
    %757 = vmatprep.subr.mxu0 0.0
    %758 = vmatpush1.msra.mxu0 0.0
    %759 = vmatprep.subr.mxu0 0.0
    %760 = vmatpush1.msra.mxu0 0.0
    %761 = vmatprep.subr.mxu0 0.0
    %762 = vmatpush1.msra.mxu0 0.0
    %763 = vmatprep.subr.mxu0 0.0
    %764 = vmatpush1.msra.mxu0 0.0
    %765 = vmatprep.subr.mxu0 0.0
    %766 = vmatpush1.msra.mxu0 0.0
    %767 = vmatprep.subr.mxu0 0.0
    %768 = vmatpush1.msra.mxu0 0.0
    %769 = vmatprep.subr.mxu0 0.0
    %770 = vmatpush1.msra.mxu0 0.0
    %771 = vmatprep.subr.mxu0 0.0
    %772 = vmatpush1.msra.mxu0 0.0
    %773 = vmatprep.subr.mxu0 0.0
    %774 = vmatpush1.msra.mxu0 0.0
    %775 = vmatprep.subr.mxu0 0.0
    %776 = vmatpush1.msra.mxu0 0.0
    %777 = vmatprep.subr.mxu0 0.0
    %778 = vmatpush1.msra.mxu0 0.0
    %779 = vmatprep.subr.mxu0 0.0
    %780 = vmatpush1.msra.mxu0 0.0
    %781 = vmatprep.subr.mxu0 0.0
    %782 = vmatpush1.msra.mxu0 0.0
    %783 = vmatprep.subr.mxu0 0.0
    %784 = vmatpush1.msra.mxu0 0.0
    %785 = vmatprep.subr.mxu0 0.0
    %786 = vmatpush1.msra.mxu0 0.0
    %787 = vmatprep.mubr.f32.mxu0 0.0
    %788 = vmatmul.mubr.f32.gmra.mrb[0].mxu0 %v721
    %v789 = vpop.f32.mrb[0].mxu0
    %v790 = vadd.f32 0.0, %v789
    %v791 = vpop.f32.mrb[0].mxu0
    %792 = vdwg.mxu0
    %v793 = vrcp.pop %v637
    %v794 = vmul.f32 1.0, %v793
    %v795 = vrcp.pop %v640
    %v796 = vmul.f32 1.0, %v795
    %v797 = vmul.f32 %v714, %v794
    %v798 = vmul.f32 %v790, %v796
    %800 = vrot.lane.b32.xlu0 %v21, 32
    %v801 = vpop.permute.xlu0 %800
    %v804 = vsel %vm137, %v797, 0
    %v807 = vsel %vm137, %v798, 0
    %809 = vmatprep.subr.mxu0 0.0
    %810 = vmatpush1.msra.mxu0 %v801
    %811 = vmatprep.subr.mxu0 0.0
    %812 = vmatpush1.msra.mxu0 0.0
    %813 = vmatprep.subr.mxu0 0.0
    %814 = vmatpush1.msra.mxu0 0.0
    %815 = vmatprep.subr.mxu0 0.0
    %816 = vmatpush1.msra.mxu0 0.0
    %817 = vmatprep.subr.mxu0 0.0
    %818 = vmatpush1.msra.mxu0 0.0
    %819 = vmatprep.subr.mxu0 0.0
    %820 = vmatpush1.msra.mxu0 0.0
    %821 = vmatprep.subr.mxu0 0.0
    %822 = vmatpush1.msra.mxu0 0.0
    %823 = vmatprep.subr.mxu0 0.0
    %824 = vmatpush1.msra.mxu0 0.0
    %825 = vmatprep.subr.mxu0 0.0
    %826 = vmatpush1.msra.mxu0 0.0
    %827 = vmatprep.subr.mxu0 0.0
    %828 = vmatpush1.msra.mxu0 0.0
    %829 = vmatprep.subr.mxu0 0.0
    %830 = vmatpush1.msra.mxu0 0.0
    %831 = vmatprep.subr.mxu0 0.0
    %832 = vmatpush1.msra.mxu0 0.0
    %833 = vmatprep.subr.mxu0 0.0
    %834 = vmatpush1.msra.mxu0 0.0
    %835 = vmatprep.subr.mxu0 0.0
    %836 = vmatpush1.msra.mxu0 0.0
    %837 = vmatprep.subr.mxu0 0.0
    %838 = vmatpush1.msra.mxu0 0.0
    %839 = vmatprep.subr.mxu0 0.0
    %840 = vmatpush1.msra.mxu0 0.0
    %841 = vmatprep.subr.mxu0 0.0
    %842 = vmatpush1.msra.mxu0 0.0
    %843 = vmatprep.subr.mxu0 0.0
    %844 = vmatpush1.msra.mxu0 0.0
    %845 = vmatprep.subr.mxu0 0.0
    %846 = vmatpush1.msra.mxu0 0.0
    %847 = vmatprep.subr.mxu0 0.0
    %848 = vmatpush1.msra.mxu0 0.0
    %849 = vmatprep.subr.mxu0 0.0
    %850 = vmatpush1.msra.mxu0 0.0
    %851 = vmatprep.subr.mxu0 0.0
    %852 = vmatpush1.msra.mxu0 0.0
    %853 = vmatprep.subr.mxu0 0.0
    %854 = vmatpush1.msra.mxu0 0.0
    %855 = vmatprep.subr.mxu0 0.0
    %856 = vmatpush1.msra.mxu0 0.0
    %857 = vmatprep.subr.mxu0 0.0
    %858 = vmatpush1.msra.mxu0 0.0
    %859 = vmatprep.subr.mxu0 0.0
    %860 = vmatpush1.msra.mxu0 0.0
    %861 = vmatprep.subr.mxu0 0.0
    %862 = vmatpush1.msra.mxu0 0.0
    %863 = vmatprep.subr.mxu0 0.0
    %864 = vmatpush1.msra.mxu0 0.0
    %865 = vmatprep.subr.mxu0 0.0
    %866 = vmatpush1.msra.mxu0 0.0
    %867 = vmatprep.subr.mxu0 0.0
    %868 = vmatpush1.msra.mxu0 0.0
    %869 = vmatprep.subr.mxu0 0.0
    %870 = vmatpush1.msra.mxu0 0.0
    %871 = vmatprep.subr.mxu0 0.0
    %872 = vmatpush1.msra.mxu0 0.0
    %873 = vmatprep.mubr.f32.mxu0 0.0
    %874 = vmatmul.mubr.f32.gmra.mrb[0].mxu0 %v804
    %v875 = vpop.f32.mrb[0].mxu0
    %v876 = vadd.f32 0.0, %v875
    %v877 = vpop.f32.mrb[0].mxu0
    %878 = vmatprep.mubr.f32.mxu0 0.0
    %879 = vmatmul.mubr.f32.gmra.mrb[0].mxu0 %v807
    %v880 = vpop.f32.mrb[0].mxu0
    %v881 = vadd.f32 0.0, %v880
    %v882 = vpop.f32.mrb[0].mxu0
    %883 = vdwg.mxu0
    %885 = vrot.lane.b32.xlu0 %v19, 32
    %v886 = vpop.permute.xlu0 %885
    %v889 = vsel %vm137, %v465, 0
    %v892 = vsel %vm137, %v466, 0
    %894 = vmatprep.subr.mxu0 0.0
    %895 = vmatpush1.msra.mxu0 %v886
    %896 = vmatprep.subr.mxu0 0.0
    %897 = vmatpush1.msra.mxu0 0.0
    %898 = vmatprep.subr.mxu0 0.0
    %899 = vmatpush1.msra.mxu0 0.0
    %900 = vmatprep.subr.mxu0 0.0
    %901 = vmatpush1.msra.mxu0 0.0
    %902 = vmatprep.subr.mxu0 0.0
    %903 = vmatpush1.msra.mxu0 0.0
    %904 = vmatprep.subr.mxu0 0.0
    %905 = vmatpush1.msra.mxu0 0.0
    %906 = vmatprep.subr.mxu0 0.0
    %907 = vmatpush1.msra.mxu0 0.0
    %908 = vmatprep.subr.mxu0 0.0
    %909 = vmatpush1.msra.mxu0 0.0
    %910 = vmatprep.subr.mxu0 0.0
    %911 = vmatpush1.msra.mxu0 0.0
    %912 = vmatprep.subr.mxu0 0.0
    %913 = vmatpush1.msra.mxu0 0.0
    %914 = vmatprep.subr.mxu0 0.0
    %915 = vmatpush1.msra.mxu0 0.0
    %916 = vmatprep.subr.mxu0 0.0
    %917 = vmatpush1.msra.mxu0 0.0
    %918 = vmatprep.subr.mxu0 0.0
    %919 = vmatpush1.msra.mxu0 0.0
    %920 = vmatprep.subr.mxu0 0.0
    %921 = vmatpush1.msra.mxu0 0.0
    %922 = vmatprep.subr.mxu0 0.0
    %923 = vmatpush1.msra.mxu0 0.0
    %924 = vmatprep.subr.mxu0 0.0
    %925 = vmatpush1.msra.mxu0 0.0
    %926 = vmatprep.subr.mxu0 0.0
    %927 = vmatpush1.msra.mxu0 0.0
    %928 = vmatprep.subr.mxu0 0.0
    %929 = vmatpush1.msra.mxu0 0.0
    %930 = vmatprep.subr.mxu0 0.0
    %931 = vmatpush1.msra.mxu0 0.0
    %932 = vmatprep.subr.mxu0 0.0
    %933 = vmatpush1.msra.mxu0 0.0
    %934 = vmatprep.subr.mxu0 0.0
    %935 = vmatpush1.msra.mxu0 0.0
    %936 = vmatprep.subr.mxu0 0.0
    %937 = vmatpush1.msra.mxu0 0.0
    %938 = vmatprep.subr.mxu0 0.0
    %939 = vmatpush1.msra.mxu0 0.0
    %940 = vmatprep.subr.mxu0 0.0
    %941 = vmatpush1.msra.mxu0 0.0
    %942 = vmatprep.subr.mxu0 0.0
    %943 = vmatpush1.msra.mxu0 0.0
    %944 = vmatprep.subr.mxu0 0.0
    %945 = vmatpush1.msra.mxu0 0.0
    %946 = vmatprep.subr.mxu0 0.0
    %947 = vmatpush1.msra.mxu0 0.0
    %948 = vmatprep.subr.mxu0 0.0
    %949 = vmatpush1.msra.mxu0 0.0
    %950 = vmatprep.subr.mxu0 0.0
    %951 = vmatpush1.msra.mxu0 0.0
    %952 = vmatprep.subr.mxu0 0.0
    %953 = vmatpush1.msra.mxu0 0.0
    %954 = vmatprep.subr.mxu0 0.0
    %955 = vmatpush1.msra.mxu0 0.0
    %956 = vmatprep.subr.mxu0 0.0
    %957 = vmatpush1.msra.mxu0 0.0
    %958 = vmatprep.mubr.f32.mxu0 0.0
    %959 = vmatmul.mubr.f32.gmra.mrb[0].mxu0 %v889
    %v960 = vpop.f32.mrb[0].mxu0
    %v961 = vadd.f32 %v876, %v960
    %v962 = vpop.f32.mrb[0].mxu0
    %963 = vmatprep.mubr.f32.mxu0 0.0
    %964 = vmatmul.mubr.f32.gmra.mrb[0].mxu0 %v892
    %v965 = vpop.f32.mrb[0].mxu0
    %v966 = vadd.f32 %v881, %v965
    %v967 = vpop.f32.mrb[0].mxu0
    %968 = vdwg.mxu0
    %969 = vrot.lane.b32.xlu0 %v116, 112
    %v970 = vpop.permute.xlu0 %969
    %971 = vrot.lane.b32.xlu0 %v126, 80
    %v972 = vpop.permute.xlu0 %971
    %v973 = vsel %vm137, %v970, 0
    %v975 = vsel %vm137, %v972, 0
    %977 = vmatprep.subr.mxu0 0.0
    %978 = vmatpush1.xpose.msra.mxu0 %v975
    %979 = vmatprep.subr.mxu0 0.0
    %980 = vmatpush1.xpose.msra.mxu0 0.0
    %981 = vmatprep.subr.mxu0 0.0
    %982 = vmatpush1.xpose.msra.mxu0 0.0
    %983 = vmatprep.subr.mxu0 0.0
    %984 = vmatpush1.xpose.msra.mxu0 0.0
    %985 = vmatprep.subr.mxu0 0.0
    %986 = vmatpush1.xpose.msra.mxu0 0.0
    %987 = vmatprep.subr.mxu0 0.0
    %988 = vmatpush1.xpose.msra.mxu0 0.0
    %989 = vmatprep.subr.mxu0 0.0
    %990 = vmatpush1.xpose.msra.mxu0 0.0
    %991 = vmatprep.subr.mxu0 0.0
    %992 = vmatpush1.xpose.msra.mxu0 0.0
    %993 = vmatprep.subr.mxu0 0.0
    %994 = vmatpush1.xpose.msra.mxu0 0.0
    %995 = vmatprep.subr.mxu0 0.0
    %996 = vmatpush1.xpose.msra.mxu0 0.0
    %997 = vmatprep.subr.mxu0 0.0
    %998 = vmatpush1.xpose.msra.mxu0 0.0
    %999 = vmatprep.subr.mxu0 0.0
    %1000 = vmatpush1.xpose.msra.mxu0 0.0
    %1001 = vmatprep.subr.mxu0 0.0
    %1002 = vmatpush1.xpose.msra.mxu0 0.0
    %1003 = vmatprep.subr.mxu0 0.0
    %1004 = vmatpush1.xpose.msra.mxu0 0.0
    %1005 = vmatprep.subr.mxu0 0.0
    %1006 = vmatpush1.xpose.msra.mxu0 0.0
    %1007 = vmatprep.subr.mxu0 0.0
    %1008 = vmatpush1.xpose.msra.mxu0 0.0
    %1009 = vmatprep.subr.mxu0 0.0
    %1010 = vmatpush1.xpose.msra.mxu0 0.0
    %1011 = vmatprep.subr.mxu0 0.0
    %1012 = vmatpush1.xpose.msra.mxu0 0.0
    %1013 = vmatprep.subr.mxu0 0.0
    %1014 = vmatpush1.xpose.msra.mxu0 0.0
    %1015 = vmatprep.subr.mxu0 0.0
    %1016 = vmatpush1.xpose.msra.mxu0 0.0
    %1017 = vmatprep.subr.mxu0 0.0
    %1018 = vmatpush1.xpose.msra.mxu0 0.0
    %1019 = vmatprep.subr.mxu0 0.0
    %1020 = vmatpush1.xpose.msra.mxu0 0.0
    %1021 = vmatprep.subr.mxu0 0.0
    %1022 = vmatpush1.xpose.msra.mxu0 0.0
    %1023 = vmatprep.subr.mxu0 0.0
    %1024 = vmatpush1.xpose.msra.mxu0 0.0
    %1025 = vmatprep.subr.mxu0 0.0
    %1026 = vmatpush1.xpose.msra.mxu0 0.0
    %1027 = vmatprep.subr.mxu0 0.0
    %1028 = vmatpush1.xpose.msra.mxu0 0.0
    %1029 = vmatprep.subr.mxu0 0.0
    %1030 = vmatpush1.xpose.msra.mxu0 0.0
    %1031 = vmatprep.subr.mxu0 0.0
    %1032 = vmatpush1.xpose.msra.mxu0 0.0
    %1033 = vmatprep.subr.mxu0 0.0
    %1034 = vmatpush1.xpose.msra.mxu0 0.0
    %1035 = vmatprep.subr.mxu0 0.0
    %1036 = vmatpush1.xpose.msra.mxu0 0.0
    %1037 = vmatprep.subr.mxu0 0.0
    %1038 = vmatpush1.xpose.msra.mxu0 0.0
    %1039 = vmatprep.subr.mxu0 0.0
    %1040 = vmatpush1.xpose.msra.mxu0 0.0
    %1041 = vmatprep.mubr.f32.mxu0 0.0
    %1042 = vmatmul.mubr.f32.gmra.mrb[0].mxu0 %v973
    %v1043 = vpop.f32.mrb[0].mxu0
    %v1044 = vadd.f32 0.0, %v1043
    %v1045 = vpop.f32.mrb[0].mxu0
    %1046 = vdwg.mxu0
    %1047 = vrot.lane.b32.xlu0 %v121, 112
    %v1048 = vpop.permute.xlu0 %1047
    %1049 = vrot.lane.b32.xlu0 %v131, 80
    %v1050 = vpop.permute.xlu0 %1049
    %v1051 = vsel %vm137, %v1048, 0
    %v1053 = vsel %vm137, %v1050, 0
    %1055 = vmatprep.subr.mxu0 0.0
    %1056 = vmatpush1.xpose.msra.mxu0 %v1053
    %1057 = vmatprep.subr.mxu0 0.0
    %1058 = vmatpush1.xpose.msra.mxu0 0.0
    %1059 = vmatprep.subr.mxu0 0.0
    %1060 = vmatpush1.xpose.msra.mxu0 0.0
    %1061 = vmatprep.subr.mxu0 0.0
    %1062 = vmatpush1.xpose.msra.mxu0 0.0
    %1063 = vmatprep.subr.mxu0 0.0
    %1064 = vmatpush1.xpose.msra.mxu0 0.0
    %1065 = vmatprep.subr.mxu0 0.0
    %1066 = vmatpush1.xpose.msra.mxu0 0.0
    %1067 = vmatprep.subr.mxu0 0.0
    %1068 = vmatpush1.xpose.msra.mxu0 0.0
    %1069 = vmatprep.subr.mxu0 0.0
    %1070 = vmatpush1.xpose.msra.mxu0 0.0
    %1071 = vmatprep.subr.mxu0 0.0
    %1072 = vmatpush1.xpose.msra.mxu0 0.0
    %1073 = vmatprep.subr.mxu0 0.0
    %1074 = vmatpush1.xpose.msra.mxu0 0.0
    %1075 = vmatprep.subr.mxu0 0.0
    %1076 = vmatpush1.xpose.msra.mxu0 0.0
    %1077 = vmatprep.subr.mxu0 0.0
    %1078 = vmatpush1.xpose.msra.mxu0 0.0
    %1079 = vmatprep.subr.mxu0 0.0
    %1080 = vmatpush1.xpose.msra.mxu0 0.0
    %1081 = vmatprep.subr.mxu0 0.0
    %1082 = vmatpush1.xpose.msra.mxu0 0.0
    %1083 = vmatprep.subr.mxu0 0.0
    %1084 = vmatpush1.xpose.msra.mxu0 0.0
    %1085 = vmatprep.subr.mxu0 0.0
    %1086 = vmatpush1.xpose.msra.mxu0 0.0
    %1087 = vmatprep.subr.mxu0 0.0
    %1088 = vmatpush1.xpose.msra.mxu0 0.0
    %1089 = vmatprep.subr.mxu0 0.0
    %1090 = vmatpush1.xpose.msra.mxu0 0.0
    %1091 = vmatprep.subr.mxu0 0.0
    %1092 = vmatpush1.xpose.msra.mxu0 0.0
    %1093 = vmatprep.subr.mxu0 0.0
    %1094 = vmatpush1.xpose.msra.mxu0 0.0
    %1095 = vmatprep.subr.mxu0 0.0
    %1096 = vmatpush1.xpose.msra.mxu0 0.0
    %1097 = vmatprep.subr.mxu0 0.0
    %1098 = vmatpush1.xpose.msra.mxu0 0.0
    %1099 = vmatprep.subr.mxu0 0.0
    %1100 = vmatpush1.xpose.msra.mxu0 0.0
    %1101 = vmatprep.subr.mxu0 0.0
    %1102 = vmatpush1.xpose.msra.mxu0 0.0
    %1103 = vmatprep.subr.mxu0 0.0
    %1104 = vmatpush1.xpose.msra.mxu0 0.0
    %1105 = vmatprep.subr.mxu0 0.0
    %1106 = vmatpush1.xpose.msra.mxu0 0.0
    %1107 = vmatprep.subr.mxu0 0.0
    %1108 = vmatpush1.xpose.msra.mxu0 0.0
    %1109 = vmatprep.subr.mxu0 0.0
    %1110 = vmatpush1.xpose.msra.mxu0 0.0
    %1111 = vmatprep.subr.mxu0 0.0
    %1112 = vmatpush1.xpose.msra.mxu0 0.0
    %1113 = vmatprep.subr.mxu0 0.0
    %1114 = vmatpush1.xpose.msra.mxu0 0.0
    %1115 = vmatprep.subr.mxu0 0.0
    %1116 = vmatpush1.xpose.msra.mxu0 0.0
    %1117 = vmatprep.subr.mxu0 0.0
    %1118 = vmatpush1.xpose.msra.mxu0 0.0
    %1119 = vmatprep.mubr.f32.mxu0 0.0
    %1120 = vmatmul.mubr.f32.gmra.mrb[0].mxu0 %v1051
    %v1121 = vpop.f32.mrb[0].mxu0
    %v1122 = vadd.f32 0.0, %v1121
    %v1123 = vpop.f32.mrb[0].mxu0
    %1124 = vdwg.mxu0
    %v1125 = vsel %vm137, %v1044, -inf
    %1126 = vmax.xlane.f32.xlu0 %v1125
    %v1127 = vpop.xlane.xlu0 %1126
    %v1128 = vsel %vm137, %v1122, -inf
    %1129 = vmax.xlane.f32.xlu0 %v1128
    %v1130 = vpop.xlane.xlu0 %1129
    %v1131 = vsub.f32 %v1044, %v1127
    %v1132 = vsub.f32 %v1122, %v1130
    %v1133 = vmul.f32 %v1131, 1.442695
    %v1134 = vpow.pop %v1133
    %v1135 = vmul.f32 %v1132, 1.442695
    %v1136 = vpow.pop %v1135
    %v1137 = vsel %vm137, %v1134, 0.0
    %1138 = vadd.xlane.f32.xlu0 %v1137
    %v1139 = vpop.xlane.xlu0 %1138
    %v1140 = vsel %vm137, %v1136, 0.0
    %1141 = vadd.xlane.f32.xlu0 %v1140
    %v1142 = vpop.xlane.xlu0 %1141
    %1143 = vrot.lane.b32.xlu0 %v126, 48
    %v1144 = vpop.permute.xlu0 %1143
    %v1147 = vsel %vm137, %v1134, 0
    %1149 = vmatprep.subr.mxu0 0.0
    %1150 = vmatpush1.msra.mxu0 %v1144
    %1151 = vmatprep.subr.mxu0 0.0
    %1152 = vmatpush1.msra.mxu0 0.0
    %1153 = vmatprep.subr.mxu0 0.0
    %1154 = vmatpush1.msra.mxu0 0.0
    %1155 = vmatprep.subr.mxu0 0.0
    %1156 = vmatpush1.msra.mxu0 0.0
    %1157 = vmatprep.subr.mxu0 0.0
    %1158 = vmatpush1.msra.mxu0 0.0
    %1159 = vmatprep.subr.mxu0 0.0
    %1160 = vmatpush1.msra.mxu0 0.0
    %1161 = vmatprep.subr.mxu0 0.0
    %1162 = vmatpush1.msra.mxu0 0.0
    %1163 = vmatprep.subr.mxu0 0.0
    %1164 = vmatpush1.msra.mxu0 0.0
    %1165 = vmatprep.subr.mxu0 0.0
    %1166 = vmatpush1.msra.mxu0 0.0
    %1167 = vmatprep.subr.mxu0 0.0
    %1168 = vmatpush1.msra.mxu0 0.0
    %1169 = vmatprep.subr.mxu0 0.0
    %1170 = vmatpush1.msra.mxu0 0.0
    %1171 = vmatprep.subr.mxu0 0.0
    %1172 = vmatpush1.msra.mxu0 0.0
    %1173 = vmatprep.subr.mxu0 0.0
    %1174 = vmatpush1.msra.mxu0 0.0
    %1175 = vmatprep.subr.mxu0 0.0
    %1176 = vmatpush1.msra.mxu0 0.0
    %1177 = vmatprep.subr.mxu0 0.0
    %1178 = vmatpush1.msra.mxu0 0.0
    %1179 = vmatprep.subr.mxu0 0.0
    %1180 = vmatpush1.msra.mxu0 0.0
    %1181 = vmatprep.subr.mxu0 0.0
    %1182 = vmatpush1.msra.mxu0 0.0
    %1183 = vmatprep.subr.mxu0 0.0
    %1184 = vmatpush1.msra.mxu0 0.0
    %1185 = vmatprep.subr.mxu0 0.0
    %1186 = vmatpush1.msra.mxu0 0.0
    %1187 = vmatprep.subr.mxu0 0.0
    %1188 = vmatpush1.msra.mxu0 0.0
    %1189 = vmatprep.subr.mxu0 0.0
    %1190 = vmatpush1.msra.mxu0 0.0
    %1191 = vmatprep.subr.mxu0 0.0
    %1192 = vmatpush1.msra.mxu0 0.0
    %1193 = vmatprep.subr.mxu0 0.0
    %1194 = vmatpush1.msra.mxu0 0.0
    %1195 = vmatprep.subr.mxu0 0.0
    %1196 = vmatpush1.msra.mxu0 0.0
    %1197 = vmatprep.subr.mxu0 0.0
    %1198 = vmatpush1.msra.mxu0 0.0
    %1199 = vmatprep.subr.mxu0 0.0
    %1200 = vmatpush1.msra.mxu0 0.0
    %1201 = vmatprep.subr.mxu0 0.0
    %1202 = vmatpush1.msra.mxu0 0.0
    %1203 = vmatprep.subr.mxu0 0.0
    %1204 = vmatpush1.msra.mxu0 0.0
    %1205 = vmatprep.subr.mxu0 0.0
    %1206 = vmatpush1.msra.mxu0 0.0
    %1207 = vmatprep.subr.mxu0 0.0
    %1208 = vmatpush1.msra.mxu0 0.0
    %1209 = vmatprep.subr.mxu0 0.0
    %1210 = vmatpush1.msra.mxu0 0.0
    %1211 = vmatprep.subr.mxu0 0.0
    %1212 = vmatpush1.msra.mxu0 0.0
    %1213 = vmatprep.mubr.f32.mxu0 0.0
    %1214 = vmatmul.mubr.f32.gmra.mrb[0].mxu0 %v1147
    %v1215 = vpop.f32.mrb[0].mxu0
    %v1216 = vadd.f32 0.0, %v1215
    %v1217 = vpop.f32.mrb[0].mxu0
    %1218 = vdwg.mxu0
    %1219 = vrot.lane.b32.xlu0 %v131, 48
    %v1220 = vpop.permute.xlu0 %1219
    %v1223 = vsel %vm137, %v1136, 0
    %1225 = vmatprep.subr.mxu0 0.0
    %1226 = vmatpush1.msra.mxu0 %v1220
    %1227 = vmatprep.subr.mxu0 0.0
    %1228 = vmatpush1.msra.mxu0 0.0
    %1229 = vmatprep.subr.mxu0 0.0
    %1230 = vmatpush1.msra.mxu0 0.0
    %1231 = vmatprep.subr.mxu0 0.0
    %1232 = vmatpush1.msra.mxu0 0.0
    %1233 = vmatprep.subr.mxu0 0.0
    %1234 = vmatpush1.msra.mxu0 0.0
    %1235 = vmatprep.subr.mxu0 0.0
    %1236 = vmatpush1.msra.mxu0 0.0
    %1237 = vmatprep.subr.mxu0 0.0
    %1238 = vmatpush1.msra.mxu0 0.0
    %1239 = vmatprep.subr.mxu0 0.0
    %1240 = vmatpush1.msra.mxu0 0.0
    %1241 = vmatprep.subr.mxu0 0.0
    %1242 = vmatpush1.msra.mxu0 0.0
    %1243 = vmatprep.subr.mxu0 0.0
    %1244 = vmatpush1.msra.mxu0 0.0
    %1245 = vmatprep.subr.mxu0 0.0
    %1246 = vmatpush1.msra.mxu0 0.0
    %1247 = vmatprep.subr.mxu0 0.0
    %1248 = vmatpush1.msra.mxu0 0.0
    %1249 = vmatprep.subr.mxu0 0.0
    %1250 = vmatpush1.msra.mxu0 0.0
    %1251 = vmatprep.subr.mxu0 0.0
    %1252 = vmatpush1.msra.mxu0 0.0
    %1253 = vmatprep.subr.mxu0 0.0
    %1254 = vmatpush1.msra.mxu0 0.0
    %1255 = vmatprep.subr.mxu0 0.0
    %1256 = vmatpush1.msra.mxu0 0.0
    %1257 = vmatprep.subr.mxu0 0.0
    %1258 = vmatpush1.msra.mxu0 0.0
    %1259 = vmatprep.subr.mxu0 0.0
    %1260 = vmatpush1.msra.mxu0 0.0
    %1261 = vmatprep.subr.mxu0 0.0
    %1262 = vmatpush1.msra.mxu0 0.0
    %1263 = vmatprep.subr.mxu0 0.0
    %1264 = vmatpush1.msra.mxu0 0.0
    %1265 = vmatprep.subr.mxu0 0.0
    %1266 = vmatpush1.msra.mxu0 0.0
    %1267 = vmatprep.subr.mxu0 0.0
    %1268 = vmatpush1.msra.mxu0 0.0
    %1269 = vmatprep.subr.mxu0 0.0
    %1270 = vmatpush1.msra.mxu0 0.0
    %1271 = vmatprep.subr.mxu0 0.0
    %1272 = vmatpush1.msra.mxu0 0.0
    %1273 = vmatprep.subr.mxu0 0.0
    %1274 = vmatpush1.msra.mxu0 0.0
    %1275 = vmatprep.subr.mxu0 0.0
    %1276 = vmatpush1.msra.mxu0 0.0
    %1277 = vmatprep.subr.mxu0 0.0
    %1278 = vmatpush1.msra.mxu0 0.0
    %1279 = vmatprep.subr.mxu0 0.0
    %1280 = vmatpush1.msra.mxu0 0.0
    %1281 = vmatprep.subr.mxu0 0.0
    %1282 = vmatpush1.msra.mxu0 0.0
    %1283 = vmatprep.subr.mxu0 0.0
    %1284 = vmatpush1.msra.mxu0 0.0
    %1285 = vmatprep.subr.mxu0 0.0
    %1286 = vmatpush1.msra.mxu0 0.0
    %1287 = vmatprep.subr.mxu0 0.0
    %1288 = vmatpush1.msra.mxu0 0.0
    %1289 = vmatprep.mubr.f32.mxu0 0.0
    %1290 = vmatmul.mubr.f32.gmra.mrb[0].mxu0 %v1223
    %v1291 = vpop.f32.mrb[0].mxu0
    %v1292 = vadd.f32 0.0, %v1291
    %v1293 = vpop.f32.mrb[0].mxu0
    %1294 = vdwg.mxu0
    %v1295 = vrcp.pop %v1139
    %v1296 = vmul.f32 1.0, %v1295
    %v1297 = vrcp.pop %v1142
    %v1298 = vmul.f32 1.0, %v1297
    %v1299 = vmul.f32 %v1216, %v1296
    %v1300 = vmul.f32 %v1292, %v1298
    %1302 = vrot.lane.b32.xlu0 %v23, 32
    %v1303 = vpop.permute.xlu0 %1302
    %v1306 = vsel %vm137, %v1299, 0
    %v1309 = vsel %vm137, %v1300, 0
    %1311 = vmatprep.subr.mxu0 0.0
    %1312 = vmatpush1.msra.mxu0 %v1303
    %1313 = vmatprep.subr.mxu0 0.0
    %1314 = vmatpush1.msra.mxu0 0.0
    %1315 = vmatprep.subr.mxu0 0.0
    %1316 = vmatpush1.msra.mxu0 0.0
    %1317 = vmatprep.subr.mxu0 0.0
    %1318 = vmatpush1.msra.mxu0 0.0
    %1319 = vmatprep.subr.mxu0 0.0
    %1320 = vmatpush1.msra.mxu0 0.0
    %1321 = vmatprep.subr.mxu0 0.0
    %1322 = vmatpush1.msra.mxu0 0.0
    %1323 = vmatprep.subr.mxu0 0.0
    %1324 = vmatpush1.msra.mxu0 0.0
    %1325 = vmatprep.subr.mxu0 0.0
    %1326 = vmatpush1.msra.mxu0 0.0
    %1327 = vmatprep.subr.mxu0 0.0
    %1328 = vmatpush1.msra.mxu0 0.0
    %1329 = vmatprep.subr.mxu0 0.0
    %1330 = vmatpush1.msra.mxu0 0.0
    %1331 = vmatprep.subr.mxu0 0.0
    %1332 = vmatpush1.msra.mxu0 0.0
    %1333 = vmatprep.subr.mxu0 0.0
    %1334 = vmatpush1.msra.mxu0 0.0
    %1335 = vmatprep.subr.mxu0 0.0
    %1336 = vmatpush1.msra.mxu0 0.0
    %1337 = vmatprep.subr.mxu0 0.0
    %1338 = vmatpush1.msra.mxu0 0.0
    %1339 = vmatprep.subr.mxu0 0.0
    %1340 = vmatpush1.msra.mxu0 0.0
    %1341 = vmatprep.subr.mxu0 0.0
    %1342 = vmatpush1.msra.mxu0 0.0
    %1343 = vmatprep.subr.mxu0 0.0
    %1344 = vmatpush1.msra.mxu0 0.0
    %1345 = vmatprep.subr.mxu0 0.0
    %1346 = vmatpush1.msra.mxu0 0.0
    %1347 = vmatprep.subr.mxu0 0.0
    %1348 = vmatpush1.msra.mxu0 0.0
    %1349 = vmatprep.subr.mxu0 0.0
    %1350 = vmatpush1.msra.mxu0 0.0
    %1351 = vmatprep.subr.mxu0 0.0
    %1352 = vmatpush1.msra.mxu0 0.0
    %1353 = vmatprep.subr.mxu0 0.0
    %1354 = vmatpush1.msra.mxu0 0.0
    %1355 = vmatprep.subr.mxu0 0.0
    %1356 = vmatpush1.msra.mxu0 0.0
    %1357 = vmatprep.subr.mxu0 0.0
    %1358 = vmatpush1.msra.mxu0 0.0
    %1359 = vmatprep.subr.mxu0 0.0
    %1360 = vmatpush1.msra.mxu0 0.0
    %1361 = vmatprep.subr.mxu0 0.0
    %1362 = vmatpush1.msra.mxu0 0.0
    %1363 = vmatprep.subr.mxu0 0.0
    %1364 = vmatpush1.msra.mxu0 0.0
    %1365 = vmatprep.subr.mxu0 0.0
    %1366 = vmatpush1.msra.mxu0 0.0
    %1367 = vmatprep.subr.mxu0 0.0
    %1368 = vmatpush1.msra.mxu0 0.0
    %1369 = vmatprep.subr.mxu0 0.0
    %1370 = vmatpush1.msra.mxu0 0.0
    %1371 = vmatprep.subr.mxu0 0.0
    %1372 = vmatpush1.msra.mxu0 0.0
    %1373 = vmatprep.subr.mxu0 0.0
    %1374 = vmatpush1.msra.mxu0 0.0
    %1375 = vmatprep.mubr.f32.mxu0 0.0
    %1376 = vmatmul.mubr.f32.gmra.mrb[0].mxu0 %v1306
    %v1377 = vpop.f32.mrb[0].mxu0
    %v1378 = vadd.f32 0.0, %v1377
    %v1379 = vpop.f32.mrb[0].mxu0
    %1380 = vmatprep.mubr.f32.mxu0 0.0
    %1381 = vmatmul.mubr.f32.gmra.mrb[0].mxu0 %v1309
    %v1382 = vpop.f32.mrb[0].mxu0
    %v1383 = vadd.f32 0.0, %v1382
    %v1384 = vpop.f32.mrb[0].mxu0
    %1385 = vdwg.mxu0
    %v1386 = vadd.f32 %v961, %v1378
    %v1387 = vadd.f32 %v966, %v1383
    %1388 = vrot.lane.b32.xlu0 %v116, 104
    %v1389 = vpop.permute.xlu0 %1388
    %1390 = vrot.lane.b32.xlu0 %v126, 72
    %v1391 = vpop.permute.xlu0 %1390
    %v1392 = vsel %vm137, %v1389, 0
    %v1394 = vsel %vm137, %v1391, 0
    %1396 = vmatprep.subr.mxu0 0.0
    %1397 = vmatpush1.xpose.msra.mxu0 %v1394
    %1398 = vmatprep.subr.mxu0 0.0
    %1399 = vmatpush1.xpose.msra.mxu0 0.0
    %1400 = vmatprep.subr.mxu0 0.0
    %1401 = vmatpush1.xpose.msra.mxu0 0.0
    %1402 = vmatprep.subr.mxu0 0.0
    %1403 = vmatpush1.xpose.msra.mxu0 0.0
    %1404 = vmatprep.subr.mxu0 0.0
    %1405 = vmatpush1.xpose.msra.mxu0 0.0
    %1406 = vmatprep.subr.mxu0 0.0
    %1407 = vmatpush1.xpose.msra.mxu0 0.0
    %1408 = vmatprep.subr.mxu0 0.0
    %1409 = vmatpush1.xpose.msra.mxu0 0.0
    %1410 = vmatprep.subr.mxu0 0.0
    %1411 = vmatpush1.xpose.msra.mxu0 0.0
    %1412 = vmatprep.subr.mxu0 0.0
    %1413 = vmatpush1.xpose.msra.mxu0 0.0
    %1414 = vmatprep.subr.mxu0 0.0
    %1415 = vmatpush1.xpose.msra.mxu0 0.0
    %1416 = vmatprep.subr.mxu0 0.0
    %1417 = vmatpush1.xpose.msra.mxu0 0.0
    %1418 = vmatprep.subr.mxu0 0.0
    %1419 = vmatpush1.xpose.msra.mxu0 0.0
    %1420 = vmatprep.subr.mxu0 0.0
    %1421 = vmatpush1.xpose.msra.mxu0 0.0
    %1422 = vmatprep.subr.mxu0 0.0
    %1423 = vmatpush1.xpose.msra.mxu0 0.0
    %1424 = vmatprep.subr.mxu0 0.0
    %1425 = vmatpush1.xpose.msra.mxu0 0.0
    %1426 = vmatprep.subr.mxu0 0.0
    %1427 = vmatpush1.xpose.msra.mxu0 0.0
    %1428 = vmatprep.subr.mxu0 0.0
    %1429 = vmatpush1.xpose.msra.mxu0 0.0
    %1430 = vmatprep.subr.mxu0 0.0
    %1431 = vmatpush1.xpose.msra.mxu0 0.0
    %1432 = vmatprep.subr.mxu0 0.0
    %1433 = vmatpush1.xpose.msra.mxu0 0.0
    %1434 = vmatprep.subr.mxu0 0.0
    %1435 = vmatpush1.xpose.msra.mxu0 0.0
    %1436 = vmatprep.subr.mxu0 0.0
    %1437 = vmatpush1.xpose.msra.mxu0 0.0
    %1438 = vmatprep.subr.mxu0 0.0
    %1439 = vmatpush1.xpose.msra.mxu0 0.0
    %1440 = vmatprep.subr.mxu0 0.0
    %1441 = vmatpush1.xpose.msra.mxu0 0.0
    %1442 = vmatprep.subr.mxu0 0.0
    %1443 = vmatpush1.xpose.msra.mxu0 0.0
    %1444 = vmatprep.subr.mxu0 0.0
    %1445 = vmatpush1.xpose.msra.mxu0 0.0
    %1446 = vmatprep.subr.mxu0 0.0
    %1447 = vmatpush1.xpose.msra.mxu0 0.0
    %1448 = vmatprep.subr.mxu0 0.0
    %1449 = vmatpush1.xpose.msra.mxu0 0.0
    %1450 = vmatprep.subr.mxu0 0.0
    %1451 = vmatpush1.xpose.msra.mxu0 0.0
    %1452 = vmatprep.subr.mxu0 0.0
    %1453 = vmatpush1.xpose.msra.mxu0 0.0
    %1454 = vmatprep.subr.mxu0 0.0
    %1455 = vmatpush1.xpose.msra.mxu0 0.0
    %1456 = vmatprep.subr.mxu0 0.0
    %1457 = vmatpush1.xpose.msra.mxu0 0.0
    %1458 = vmatprep.subr.mxu0 0.0
    %1459 = vmatpush1.xpose.msra.mxu0 0.0
    %1460 = vmatprep.mubr.f32.mxu0 0.0
    %1461 = vmatmul.mubr.f32.gmra.mrb[0].mxu0 %v1392
    %v1462 = vpop.f32.mrb[0].mxu0
    %v1463 = vadd.f32 0.0, %v1462
    %v1464 = vpop.f32.mrb[0].mxu0
    %1465 = vdwg.mxu0
    %1466 = vrot.lane.b32.xlu0 %v121, 104
    %v1467 = vpop.permute.xlu0 %1466
    %1468 = vrot.lane.b32.xlu0 %v131, 72
    %v1469 = vpop.permute.xlu0 %1468
    %v1470 = vsel %vm137, %v1467, 0
    %v1472 = vsel %vm137, %v1469, 0
    %1474 = vmatprep.subr.mxu0 0.0
    %1475 = vmatpush1.xpose.msra.mxu0 %v1472
    %1476 = vmatprep.subr.mxu0 0.0
    %1477 = vmatpush1.xpose.msra.mxu0 0.0
    %1478 = vmatprep.subr.mxu0 0.0
    %1479 = vmatpush1.xpose.msra.mxu0 0.0
    %1480 = vmatprep.subr.mxu0 0.0
    %1481 = vmatpush1.xpose.msra.mxu0 0.0
    %1482 = vmatprep.subr.mxu0 0.0
    %1483 = vmatpush1.xpose.msra.mxu0 0.0
    %1484 = vmatprep.subr.mxu0 0.0
    %1485 = vmatpush1.xpose.msra.mxu0 0.0
    %1486 = vmatprep.subr.mxu0 0.0
    %1487 = vmatpush1.xpose.msra.mxu0 0.0
    %1488 = vmatprep.subr.mxu0 0.0
    %1489 = vmatpush1.xpose.msra.mxu0 0.0
    %1490 = vmatprep.subr.mxu0 0.0
    %1491 = vmatpush1.xpose.msra.mxu0 0.0
    %1492 = vmatprep.subr.mxu0 0.0
    %1493 = vmatpush1.xpose.msra.mxu0 0.0
    %1494 = vmatprep.subr.mxu0 0.0
    %1495 = vmatpush1.xpose.msra.mxu0 0.0
    %1496 = vmatprep.subr.mxu0 0.0
    %1497 = vmatpush1.xpose.msra.mxu0 0.0
    %1498 = vmatprep.subr.mxu0 0.0
    %1499 = vmatpush1.xpose.msra.mxu0 0.0
    %1500 = vmatprep.subr.mxu0 0.0
    %1501 = vmatpush1.xpose.msra.mxu0 0.0
    %1502 = vmatprep.subr.mxu0 0.0
    %1503 = vmatpush1.xpose.msra.mxu0 0.0
    %1504 = vmatprep.subr.mxu0 0.0
    %1505 = vmatpush1.xpose.msra.mxu0 0.0
    %1506 = vmatprep.subr.mxu0 0.0
    %1507 = vmatpush1.xpose.msra.mxu0 0.0
    %1508 = vmatprep.subr.mxu0 0.0
    %1509 = vmatpush1.xpose.msra.mxu0 0.0
    %1510 = vmatprep.subr.mxu0 0.0
    %1511 = vmatpush1.xpose.msra.mxu0 0.0
    %1512 = vmatprep.subr.mxu0 0.0
    %1513 = vmatpush1.xpose.msra.mxu0 0.0
    %1514 = vmatprep.subr.mxu0 0.0
    %1515 = vmatpush1.xpose.msra.mxu0 0.0
    %1516 = vmatprep.subr.mxu0 0.0
    %1517 = vmatpush1.xpose.msra.mxu0 0.0
    %1518 = vmatprep.subr.mxu0 0.0
    %1519 = vmatpush1.xpose.msra.mxu0 0.0
    %1520 = vmatprep.subr.mxu0 0.0
    %1521 = vmatpush1.xpose.msra.mxu0 0.0
    %1522 = vmatprep.subr.mxu0 0.0
    %1523 = vmatpush1.xpose.msra.mxu0 0.0
    %1524 = vmatprep.subr.mxu0 0.0
    %1525 = vmatpush1.xpose.msra.mxu0 0.0
    %1526 = vmatprep.subr.mxu0 0.0
    %1527 = vmatpush1.xpose.msra.mxu0 0.0
    %1528 = vmatprep.subr.mxu0 0.0
    %1529 = vmatpush1.xpose.msra.mxu0 0.0
    %1530 = vmatprep.subr.mxu0 0.0
    %1531 = vmatpush1.xpose.msra.mxu0 0.0
    %1532 = vmatprep.subr.mxu0 0.0
    %1533 = vmatpush1.xpose.msra.mxu0 0.0
    %1534 = vmatprep.subr.mxu0 0.0
    %1535 = vmatpush1.xpose.msra.mxu0 0.0
    %1536 = vmatprep.subr.mxu0 0.0
    %1537 = vmatpush1.xpose.msra.mxu0 0.0
    %1538 = vmatprep.mubr.f32.mxu0 0.0
    %1539 = vmatmul.mubr.f32.gmra.mrb[0].mxu0 %v1470
    %v1540 = vpop.f32.mrb[0].mxu0
    %v1541 = vadd.f32 0.0, %v1540
    %v1542 = vpop.f32.mrb[0].mxu0
    %1543 = vdwg.mxu0
    %v1544 = vsel %vm137, %v1463, -inf
    %1545 = vmax.xlane.f32.xlu0 %v1544
    %v1546 = vpop.xlane.xlu0 %1545
    %v1547 = vsel %vm137, %v1541, -inf
    %1548 = vmax.xlane.f32.xlu0 %v1547
    %v1549 = vpop.xlane.xlu0 %1548
    %v1550 = vsub.f32 %v1463, %v1546
    %v1551 = vsub.f32 %v1541, %v1549
    %v1552 = vmul.f32 %v1550, 1.442695
    %v1553 = vpow.pop %v1552
    %v1554 = vmul.f32 %v1551, 1.442695
    %v1555 = vpow.pop %v1554
    %v1556 = vsel %vm137, %v1553, 0.0
    %1557 = vadd.xlane.f32.xlu0 %v1556
    %v1558 = vpop.xlane.xlu0 %1557
    %v1559 = vsel %vm137, %v1555, 0.0
    %1560 = vadd.xlane.f32.xlu0 %v1559
    %v1561 = vpop.xlane.xlu0 %1560
    %1562 = vrot.lane.b32.xlu0 %v126, 40
    %v1563 = vpop.permute.xlu0 %1562
    %v1566 = vsel %vm137, %v1553, 0
    %1568 = vmatprep.subr.mxu0 0.0
    %1569 = vmatpush1.msra.mxu0 %v1563
    %1570 = vmatprep.subr.mxu0 0.0
    %1571 = vmatpush1.msra.mxu0 0.0
    %1572 = vmatprep.subr.mxu0 0.0
    %1573 = vmatpush1.msra.mxu0 0.0
    %1574 = vmatprep.subr.mxu0 0.0
    %1575 = vmatpush1.msra.mxu0 0.0
    %1576 = vmatprep.subr.mxu0 0.0
    %1577 = vmatpush1.msra.mxu0 0.0
    %1578 = vmatprep.subr.mxu0 0.0
    %1579 = vmatpush1.msra.mxu0 0.0
    %1580 = vmatprep.subr.mxu0 0.0
    %1581 = vmatpush1.msra.mxu0 0.0
    %1582 = vmatprep.subr.mxu0 0.0
    %1583 = vmatpush1.msra.mxu0 0.0
    %1584 = vmatprep.subr.mxu0 0.0
    %1585 = vmatpush1.msra.mxu0 0.0
    %1586 = vmatprep.subr.mxu0 0.0
    %1587 = vmatpush1.msra.mxu0 0.0
    %1588 = vmatprep.subr.mxu0 0.0
    %1589 = vmatpush1.msra.mxu0 0.0
    %1590 = vmatprep.subr.mxu0 0.0
    %1591 = vmatpush1.msra.mxu0 0.0
    %1592 = vmatprep.subr.mxu0 0.0
    %1593 = vmatpush1.msra.mxu0 0.0
    %1594 = vmatprep.subr.mxu0 0.0
    %1595 = vmatpush1.msra.mxu0 0.0
    %1596 = vmatprep.subr.mxu0 0.0
    %1597 = vmatpush1.msra.mxu0 0.0
    %1598 = vmatprep.subr.mxu0 0.0
    %1599 = vmatpush1.msra.mxu0 0.0
    %1600 = vmatprep.subr.mxu0 0.0
    %1601 = vmatpush1.msra.mxu0 0.0
    %1602 = vmatprep.subr.mxu0 0.0
    %1603 = vmatpush1.msra.mxu0 0.0
    %1604 = vmatprep.subr.mxu0 0.0
    %1605 = vmatpush1.msra.mxu0 0.0
    %1606 = vmatprep.subr.mxu0 0.0
    %1607 = vmatpush1.msra.mxu0 0.0
    %1608 = vmatprep.subr.mxu0 0.0
    %1609 = vmatpush1.msra.mxu0 0.0
    %1610 = vmatprep.subr.mxu0 0.0
    %1611 = vmatpush1.msra.mxu0 0.0
    %1612 = vmatprep.subr.mxu0 0.0
    %1613 = vmatpush1.msra.mxu0 0.0
    %1614 = vmatprep.subr.mxu0 0.0
    %1615 = vmatpush1.msra.mxu0 0.0
    %1616 = vmatprep.subr.mxu0 0.0
    %1617 = vmatpush1.msra.mxu0 0.0
    %1618 = vmatprep.subr.mxu0 0.0
    %1619 = vmatpush1.msra.mxu0 0.0
    %1620 = vmatprep.subr.mxu0 0.0
    %1621 = vmatpush1.msra.mxu0 0.0
    %1622 = vmatprep.subr.mxu0 0.0
    %1623 = vmatpush1.msra.mxu0 0.0
    %1624 = vmatprep.subr.mxu0 0.0
    %1625 = vmatpush1.msra.mxu0 0.0
    %1626 = vmatprep.subr.mxu0 0.0
    %1627 = vmatpush1.msra.mxu0 0.0
    %1628 = vmatprep.subr.mxu0 0.0
    %1629 = vmatpush1.msra.mxu0 0.0
    %1630 = vmatprep.subr.mxu0 0.0
    %1631 = vmatpush1.msra.mxu0 0.0
    %1632 = vmatprep.mubr.f32.mxu0 0.0
    %1633 = vmatmul.mubr.f32.gmra.mrb[0].mxu0 %v1566
    %v1634 = vpop.f32.mrb[0].mxu0
    %v1635 = vadd.f32 0.0, %v1634
    %v1636 = vpop.f32.mrb[0].mxu0
    %1637 = vdwg.mxu0
    %1638 = vrot.lane.b32.xlu0 %v131, 40
    %v1639 = vpop.permute.xlu0 %1638
    %v1642 = vsel %vm137, %v1555, 0
    %1644 = vmatprep.subr.mxu0 0.0
    %1645 = vmatpush1.msra.mxu0 %v1639
    %1646 = vmatprep.subr.mxu0 0.0
    %1647 = vmatpush1.msra.mxu0 0.0
    %1648 = vmatprep.subr.mxu0 0.0
    %1649 = vmatpush1.msra.mxu0 0.0
    %1650 = vmatprep.subr.mxu0 0.0
    %1651 = vmatpush1.msra.mxu0 0.0
    %1652 = vmatprep.subr.mxu0 0.0
    %1653 = vmatpush1.msra.mxu0 0.0
    %1654 = vmatprep.subr.mxu0 0.0
    %1655 = vmatpush1.msra.mxu0 0.0
    %1656 = vmatprep.subr.mxu0 0.0
    %1657 = vmatpush1.msra.mxu0 0.0
    %1658 = vmatprep.subr.mxu0 0.0
    %1659 = vmatpush1.msra.mxu0 0.0
    %1660 = vmatprep.subr.mxu0 0.0
    %1661 = vmatpush1.msra.mxu0 0.0
    %1662 = vmatprep.subr.mxu0 0.0
    %1663 = vmatpush1.msra.mxu0 0.0
    %1664 = vmatprep.subr.mxu0 0.0
    %1665 = vmatpush1.msra.mxu0 0.0
    %1666 = vmatprep.subr.mxu0 0.0
    %1667 = vmatpush1.msra.mxu0 0.0
    %1668 = vmatprep.subr.mxu0 0.0
    %1669 = vmatpush1.msra.mxu0 0.0
    %1670 = vmatprep.subr.mxu0 0.0
    %1671 = vmatpush1.msra.mxu0 0.0
    %1672 = vmatprep.subr.mxu0 0.0
    %1673 = vmatpush1.msra.mxu0 0.0
    %1674 = vmatprep.subr.mxu0 0.0
    %1675 = vmatpush1.msra.mxu0 0.0
    %1676 = vmatprep.subr.mxu0 0.0
    %1677 = vmatpush1.msra.mxu0 0.0
    %1678 = vmatprep.subr.mxu0 0.0
    %1679 = vmatpush1.msra.mxu0 0.0
    %1680 = vmatprep.subr.mxu0 0.0
    %1681 = vmatpush1.msra.mxu0 0.0
    %1682 = vmatprep.subr.mxu0 0.0
    %1683 = vmatpush1.msra.mxu0 0.0
    %1684 = vmatprep.subr.mxu0 0.0
    %1685 = vmatpush1.msra.mxu0 0.0
    %1686 = vmatprep.subr.mxu0 0.0
    %1687 = vmatpush1.msra.mxu0 0.0
    %1688 = vmatprep.subr.mxu0 0.0
    %1689 = vmatpush1.msra.mxu0 0.0
    %1690 = vmatprep.subr.mxu0 0.0
    %1691 = vmatpush1.msra.mxu0 0.0
    %1692 = vmatprep.subr.mxu0 0.0
    %1693 = vmatpush1.msra.mxu0 0.0
    %1694 = vmatprep.subr.mxu0 0.0
    %1695 = vmatpush1.msra.mxu0 0.0
    %1696 = vmatprep.subr.mxu0 0.0
    %1697 = vmatpush1.msra.mxu0 0.0
    %1698 = vmatprep.subr.mxu0 0.0
    %1699 = vmatpush1.msra.mxu0 0.0
    %1700 = vmatprep.subr.mxu0 0.0
    %1701 = vmatpush1.msra.mxu0 0.0
    %1702 = vmatprep.subr.mxu0 0.0
    %1703 = vmatpush1.msra.mxu0 0.0
    %1704 = vmatprep.subr.mxu0 0.0
    %1705 = vmatpush1.msra.mxu0 0.0
    %1706 = vmatprep.subr.mxu0 0.0
    %1707 = vmatpush1.msra.mxu0 0.0
    %1708 = vmatprep.mubr.f32.mxu0 0.0
    %1709 = vmatmul.mubr.f32.gmra.mrb[0].mxu0 %v1642
    %v1710 = vpop.f32.mrb[0].mxu0
    %v1711 = vadd.f32 0.0, %v1710
    %v1712 = vpop.f32.mrb[0].mxu0
    %1713 = vdwg.mxu0
    %v1714 = vrcp.pop %v1558
    %v1715 = vmul.f32 1.0, %v1714
    %v1716 = vrcp.pop %v1561
    %v1717 = vmul.f32 1.0, %v1716
    %v1718 = vmul.f32 %v1635, %v1715
    %v1719 = vmul.f32 %v1711, %v1717
    %1721 = vrot.lane.b32.xlu0 %v25, 32
    %v1722 = vpop.permute.xlu0 %1721
    %v1725 = vsel %vm137, %v1718, 0
    %v1728 = vsel %vm137, %v1719, 0
    %1730 = vmatprep.subr.mxu0 0.0
    %1731 = vmatpush1.msra.mxu0 %v1722
    %1732 = vmatprep.subr.mxu0 0.0
    %1733 = vmatpush1.msra.mxu0 0.0
    %1734 = vmatprep.subr.mxu0 0.0
    %1735 = vmatpush1.msra.mxu0 0.0
    %1736 = vmatprep.subr.mxu0 0.0
    %1737 = vmatpush1.msra.mxu0 0.0
    %1738 = vmatprep.subr.mxu0 0.0
    %1739 = vmatpush1.msra.mxu0 0.0
    %1740 = vmatprep.subr.mxu0 0.0
    %1741 = vmatpush1.msra.mxu0 0.0
    %1742 = vmatprep.subr.mxu0 0.0
    %1743 = vmatpush1.msra.mxu0 0.0
    %1744 = vmatprep.subr.mxu0 0.0
    %1745 = vmatpush1.msra.mxu0 0.0
    %1746 = vmatprep.subr.mxu0 0.0
    %1747 = vmatpush1.msra.mxu0 0.0
    %1748 = vmatprep.subr.mxu0 0.0
    %1749 = vmatpush1.msra.mxu0 0.0
    %1750 = vmatprep.subr.mxu0 0.0
    %1751 = vmatpush1.msra.mxu0 0.0
    %1752 = vmatprep.subr.mxu0 0.0
    %1753 = vmatpush1.msra.mxu0 0.0
    %1754 = vmatprep.subr.mxu0 0.0
    %1755 = vmatpush1.msra.mxu0 0.0
    %1756 = vmatprep.subr.mxu0 0.0
    %1757 = vmatpush1.msra.mxu0 0.0
    %1758 = vmatprep.subr.mxu0 0.0
    %1759 = vmatpush1.msra.mxu0 0.0
    %1760 = vmatprep.subr.mxu0 0.0
    %1761 = vmatpush1.msra.mxu0 0.0
    %1762 = vmatprep.subr.mxu0 0.0
    %1763 = vmatpush1.msra.mxu0 0.0
    %1764 = vmatprep.subr.mxu0 0.0
    %1765 = vmatpush1.msra.mxu0 0.0
    %1766 = vmatprep.subr.mxu0 0.0
    %1767 = vmatpush1.msra.mxu0 0.0
    %1768 = vmatprep.subr.mxu0 0.0
    %1769 = vmatpush1.msra.mxu0 0.0
    %1770 = vmatprep.subr.mxu0 0.0
    %1771 = vmatpush1.msra.mxu0 0.0
    %1772 = vmatprep.subr.mxu0 0.0
    %1773 = vmatpush1.msra.mxu0 0.0
    %1774 = vmatprep.subr.mxu0 0.0
    %1775 = vmatpush1.msra.mxu0 0.0
    %1776 = vmatprep.subr.mxu0 0.0
    %1777 = vmatpush1.msra.mxu0 0.0
    %1778 = vmatprep.subr.mxu0 0.0
    %1779 = vmatpush1.msra.mxu0 0.0
    %1780 = vmatprep.subr.mxu0 0.0
    %1781 = vmatpush1.msra.mxu0 0.0
    %1782 = vmatprep.subr.mxu0 0.0
    %1783 = vmatpush1.msra.mxu0 0.0
    %1784 = vmatprep.subr.mxu0 0.0
    %1785 = vmatpush1.msra.mxu0 0.0
    %1786 = vmatprep.subr.mxu0 0.0
    %1787 = vmatpush1.msra.mxu0 0.0
    %1788 = vmatprep.subr.mxu0 0.0
    %1789 = vmatpush1.msra.mxu0 0.0
    %1790 = vmatprep.subr.mxu0 0.0
    %1791 = vmatpush1.msra.mxu0 0.0
    %1792 = vmatprep.subr.mxu0 0.0
    %1793 = vmatpush1.msra.mxu0 0.0
    %1794 = vmatprep.mubr.f32.mxu0 0.0
    %1795 = vmatmul.mubr.f32.gmra.mrb[0].mxu0 %v1725
    %v1796 = vpop.f32.mrb[0].mxu0
    %v1797 = vadd.f32 0.0, %v1796
    %v1798 = vpop.f32.mrb[0].mxu0
    %1799 = vmatprep.mubr.f32.mxu0 0.0
    %1800 = vmatmul.mubr.f32.gmra.mrb[0].mxu0 %v1728
    %v1801 = vpop.f32.mrb[0].mxu0
    %v1802 = vadd.f32 0.0, %v1801
    %v1803 = vpop.f32.mrb[0].mxu0
    %1804 = vdwg.mxu0
    %v1805 = vadd.f32 %v1386, %v1797
    %v1806 = vadd.f32 %v1387, %v1802
    %v1807 = vlaneseq
    %v1808 = vshrl.u32 %v1807, 7
    %v1809 = vsub.s32 0, %v1808
    %v1810 = vrot.slane %v35, %v1809
    %v1811 = vadd.f32 %v1805, %v1810
    %v1812 = vadd.f32 %v1806, %v1810
    %v1813 = vadd.f32 %v15, %v1811
    %v1814 = vadd.f32 %v16, %v1812
    %v1815 = vsel %vm36, %v1813, 0.0
    %v1816 = vrot.slane %v1815, 4
    %v1817 = vadd.f32 %v1815, %v1816
    %v1818 = vrot.slane %v1817, 2
    %v1819 = vadd.f32 %v1817, %v1818
    %v1820 = vrot.slane %v1819, 1
    %v1821 = vadd.f32 %v1819, %v1820
    %v1822 = vsel %vm36, %v1814, 0.0
    %v1823 = vrot.slane %v1822, 4
    %v1824 = vadd.f32 %v1822, %v1823
    %v1825 = vrot.slane %v1824, 2
    %v1826 = vadd.f32 %v1824, %v1825
    %v1827 = vrot.slane %v1826, 1
    %v1828 = vadd.f32 %v1826, %v1827
    %v1829 = vrcp.pop 8.0
    %v1830 = vmul.f32 %v1821, %v1829
    %v1831 = vmul.f32 %v1828, %v1829
    %v1832 = vsub.f32 %v1813, %v1830
    %v1833 = vsub.f32 %v1814, %v1831
    %v1834 = vmul.f32 %v1832, %v1832
    %v1835 = vmul.f32 %v1833, %v1833
    %v1836 = vsel %vm36, %v1834, 0.0
    %v1837 = vrot.slane %v1836, 4
    %v1838 = vadd.f32 %v1836, %v1837
    %v1839 = vrot.slane %v1838, 2
    %v1840 = vadd.f32 %v1838, %v1839
    %v1841 = vrot.slane %v1840, 1
    %v1842 = vadd.f32 %v1840, %v1841
    %v1843 = vsel %vm36, %v1835, 0.0
    %v1844 = vrot.slane %v1843, 4
    %v1845 = vadd.f32 %v1843, %v1844
    %v1846 = vrot.slane %v1845, 2
    %v1847 = vadd.f32 %v1845, %v1846
    %v1848 = vrot.slane %v1847, 1
    %v1849 = vadd.f32 %v1847, %v1848
    %v1850 = vmul.f32 %v1842, %v1829
    %v1851 = vmul.f32 %v1849, %v1829
    %v1852 = vadd.f32 %v1850, 1e-05
    %v1853 = vadd.f32 %v1851, 1e-05
    %v1854 = vrsqrt.pop %v1852
    %v1855 = vrsqrt.pop %v1853
    %v1856 = vmul.f32 %v1832, %v1854
    %v1857 = vmul.f32 %v1833, %v1855
    %v1858 = vlaneseq
    %v1859 = vshrl.u32 %v1858, 7
    %v1860 = vsub.s32 1, %v1859
    %v1861 = vrot.slane %v35, %v1860
    %v1862 = vmul.f32 %v1856, %v1861
    %v1863 = vmul.f32 %v1857, %v1861
    %v1864 = vlaneseq
    %v1865 = vshrl.u32 %v1864, 7
    %v1866 = vsub.s32 2, %v1865
    %v1867 = vrot.slane %v35, %v1866
    %v1868 = vadd.f32 %v1862, %v1867
    %v1869 = vadd.f32 %v1863, %v1867
    %v1870 = vlaneseq
    %v1871 = vshrl.u32 %v1870, 7
    %v1872 = vsub.s32 6, %v1871
    %v1873 = vrot.slane %v35, %v1872
    %v1875 = vsel %vm36, %v1868, 0
    %v1878 = vsel %vm36, %v1869, 0
    %1880 = vmatprep.subr.mxu0 0.0
    %1881 = vmatpush1.msra.mxu0 %v20
    %1882 = vmatprep.subr.mxu0 0.0
    %1883 = vmatpush1.msra.mxu0 %v22
    %1884 = vmatprep.subr.mxu0 0.0
    %1885 = vmatpush1.msra.mxu0 %v24
    %1886 = vmatprep.subr.mxu0 0.0
    %1887 = vmatpush1.msra.mxu0 %v26
    %1888 = vmatprep.subr.mxu0 0.0
    %1889 = vmatpush1.msra.mxu0 0.0
    %1890 = vmatprep.subr.mxu0 0.0
    %1891 = vmatpush1.msra.mxu0 0.0
    %1892 = vmatprep.subr.mxu0 0.0
    %1893 = vmatpush1.msra.mxu0 0.0
    %1894 = vmatprep.subr.mxu0 0.0
    %1895 = vmatpush1.msra.mxu0 0.0
    %1896 = vmatprep.subr.mxu0 0.0
    %1897 = vmatpush1.msra.mxu0 0.0
    %1898 = vmatprep.subr.mxu0 0.0
    %1899 = vmatpush1.msra.mxu0 0.0
    %1900 = vmatprep.subr.mxu0 0.0
    %1901 = vmatpush1.msra.mxu0 0.0
    %1902 = vmatprep.subr.mxu0 0.0
    %1903 = vmatpush1.msra.mxu0 0.0
    %1904 = vmatprep.subr.mxu0 0.0
    %1905 = vmatpush1.msra.mxu0 0.0
    %1906 = vmatprep.subr.mxu0 0.0
    %1907 = vmatpush1.msra.mxu0 0.0
    %1908 = vmatprep.subr.mxu0 0.0
    %1909 = vmatpush1.msra.mxu0 0.0
    %1910 = vmatprep.subr.mxu0 0.0
    %1911 = vmatpush1.msra.mxu0 0.0
    %1912 = vmatprep.subr.mxu0 0.0
    %1913 = vmatpush1.msra.mxu0 0.0
    %1914 = vmatprep.subr.mxu0 0.0
    %1915 = vmatpush1.msra.mxu0 0.0
    %1916 = vmatprep.subr.mxu0 0.0
    %1917 = vmatpush1.msra.mxu0 0.0
    %1918 = vmatprep.subr.mxu0 0.0
    %1919 = vmatpush1.msra.mxu0 0.0
    %1920 = vmatprep.subr.mxu0 0.0
    %1921 = vmatpush1.msra.mxu0 0.0
    %1922 = vmatprep.subr.mxu0 0.0
    %1923 = vmatpush1.msra.mxu0 0.0
    %1924 = vmatprep.subr.mxu0 0.0
    %1925 = vmatpush1.msra.mxu0 0.0
    %1926 = vmatprep.subr.mxu0 0.0
    %1927 = vmatpush1.msra.mxu0 0.0
    %1928 = vmatprep.subr.mxu0 0.0
    %1929 = vmatpush1.msra.mxu0 0.0
    %1930 = vmatprep.subr.mxu0 0.0
    %1931 = vmatpush1.msra.mxu0 0.0
    %1932 = vmatprep.subr.mxu0 0.0
    %1933 = vmatpush1.msra.mxu0 0.0
    %1934 = vmatprep.subr.mxu0 0.0
    %1935 = vmatpush1.msra.mxu0 0.0
    %1936 = vmatprep.subr.mxu0 0.0
    %1937 = vmatpush1.msra.mxu0 0.0
    %1938 = vmatprep.subr.mxu0 0.0
    %1939 = vmatpush1.msra.mxu0 0.0
    %1940 = vmatprep.subr.mxu0 0.0
    %1941 = vmatpush1.msra.mxu0 0.0
    %1942 = vmatprep.subr.mxu0 0.0
    %1943 = vmatpush1.msra.mxu0 0.0
    %1944 = vmatprep.mubr.f32.mxu0 0.0
    %1945 = vmatmul.mubr.f32.gmra.mrb[0].mxu0 %v1875
    %v1946 = vpop.f32.mrb[0].mxu0
    %v1947 = vadd.f32 %v1873, %v1946
    %v1948 = vpop.f32.mrb[0].mxu0
    %1949 = vmatprep.mubr.f32.mxu0 0.0
    %1950 = vmatmul.mubr.f32.gmra.mrb[0].mxu0 %v1878
    %v1951 = vpop.f32.mrb[0].mxu0
    %v1952 = vadd.f32 %v1873, %v1951
    %v1953 = vpop.f32.mrb[0].mxu0
    %1954 = vdwg.mxu0
    %v1955 = vmax.f32 %v1947, 0.0
    %v1956 = vmax.f32 %v1952, 0.0
    %v1957 = vlaneseq
    %v1958 = vshrl.u32 %v1957, 7
    %v1959 = vsub.s32 3, %v1958
    %v1960 = vrot.slane %v35, %v1959
    %vm1961 = vcmask 523264
    %v1963 = vsel %vm1961, %v1955, 0
    %v1966 = vsel %vm1961, %v1956, 0
    %1968 = vmatprep.subr.mxu0 0.0
    %1969 = vmatpush1.msra.mxu0 %v27
    %1970 = vmatprep.subr.mxu0 0.0
    %1971 = vmatpush1.msra.mxu0 %v28
    %1972 = vmatprep.subr.mxu0 0.0
    %1973 = vmatpush1.msra.mxu0 %v29
    %1974 = vmatprep.subr.mxu0 0.0
    %1975 = vmatpush1.msra.mxu0 %v30
    %1976 = vmatprep.subr.mxu0 0.0
    %1977 = vmatpush1.msra.mxu0 %v31
    %1978 = vmatprep.subr.mxu0 0.0
    %1979 = vmatpush1.msra.mxu0 %v32
    %1980 = vmatprep.subr.mxu0 0.0
    %1981 = vmatpush1.msra.mxu0 %v33
    %1982 = vmatprep.subr.mxu0 0.0
    %1983 = vmatpush1.msra.mxu0 %v34
    %1984 = vmatprep.subr.mxu0 0.0
    %1985 = vmatpush1.msra.mxu0 0.0
    %1986 = vmatprep.subr.mxu0 0.0
    %1987 = vmatpush1.msra.mxu0 0.0
    %1988 = vmatprep.subr.mxu0 0.0
    %1989 = vmatpush1.msra.mxu0 0.0
    %1990 = vmatprep.subr.mxu0 0.0
    %1991 = vmatpush1.msra.mxu0 0.0
    %1992 = vmatprep.subr.mxu0 0.0
    %1993 = vmatpush1.msra.mxu0 0.0
    %1994 = vmatprep.subr.mxu0 0.0
    %1995 = vmatpush1.msra.mxu0 0.0
    %1996 = vmatprep.subr.mxu0 0.0
    %1997 = vmatpush1.msra.mxu0 0.0
    %1998 = vmatprep.subr.mxu0 0.0
    %1999 = vmatpush1.msra.mxu0 0.0
    %2000 = vmatprep.subr.mxu0 0.0
    %2001 = vmatpush1.msra.mxu0 0.0
    %2002 = vmatprep.subr.mxu0 0.0
    %2003 = vmatpush1.msra.mxu0 0.0
    %2004 = vmatprep.subr.mxu0 0.0
    %2005 = vmatpush1.msra.mxu0 0.0
    %2006 = vmatprep.subr.mxu0 0.0
    %2007 = vmatpush1.msra.mxu0 0.0
    %2008 = vmatprep.subr.mxu0 0.0
    %2009 = vmatpush1.msra.mxu0 0.0
    %2010 = vmatprep.subr.mxu0 0.0
    %2011 = vmatpush1.msra.mxu0 0.0
    %2012 = vmatprep.subr.mxu0 0.0
    %2013 = vmatpush1.msra.mxu0 0.0
    %2014 = vmatprep.subr.mxu0 0.0
    %2015 = vmatpush1.msra.mxu0 0.0
    %2016 = vmatprep.subr.mxu0 0.0
    %2017 = vmatpush1.msra.mxu0 0.0
    %2018 = vmatprep.subr.mxu0 0.0
    %2019 = vmatpush1.msra.mxu0 0.0
    %2020 = vmatprep.subr.mxu0 0.0
    %2021 = vmatpush1.msra.mxu0 0.0
    %2022 = vmatprep.subr.mxu0 0.0
    %2023 = vmatpush1.msra.mxu0 0.0
    %2024 = vmatprep.subr.mxu0 0.0
    %2025 = vmatpush1.msra.mxu0 0.0
    %2026 = vmatprep.subr.mxu0 0.0
    %2027 = vmatpush1.msra.mxu0 0.0
    %2028 = vmatprep.subr.mxu0 0.0
    %2029 = vmatpush1.msra.mxu0 0.0
    %2030 = vmatprep.subr.mxu0 0.0
    %2031 = vmatpush1.msra.mxu0 0.0
    %2032 = vmatprep.mubr.f32.mxu0 0.0
    %2033 = vmatmul.mubr.f32.gmra.mrb[0].mxu0 %v1963
    %v2034 = vpop.f32.mrb[0].mxu0
    %v2035 = vadd.f32 %v1960, %v2034
    %v2036 = vpop.f32.mrb[0].mxu0
    %2037 = vmatprep.mubr.f32.mxu0 0.0
    %2038 = vmatmul.mubr.f32.gmra.mrb[0].mxu0 %v1966
    %v2039 = vpop.f32.mrb[0].mxu0
    %v2040 = vadd.f32 %v1960, %v2039
    %v2041 = vpop.f32.mrb[0].mxu0
    %2042 = vdwg.mxu0
    %v2043 = vadd.f32 %v1868, %v2035
    %v2044 = vadd.f32 %v1869, %v2040
    %v2045 = vsel %vm36, %v2043, 0.0
    %v2046 = vrot.slane %v2045, 4
    %v2047 = vadd.f32 %v2045, %v2046
    %v2048 = vrot.slane %v2047, 2
    %v2049 = vadd.f32 %v2047, %v2048
    %v2050 = vrot.slane %v2049, 1
    %v2051 = vadd.f32 %v2049, %v2050
    %v2052 = vsel %vm36, %v2044, 0.0
    %v2053 = vrot.slane %v2052, 4
    %v2054 = vadd.f32 %v2052, %v2053
    %v2055 = vrot.slane %v2054, 2
    %v2056 = vadd.f32 %v2054, %v2055
    %v2057 = vrot.slane %v2056, 1
    %v2058 = vadd.f32 %v2056, %v2057
    %v2059 = vmul.f32 %v2051, %v1829
    %v2060 = vmul.f32 %v2058, %v1829
    %v2061 = vsub.f32 %v2043, %v2059
    %v2062 = vsub.f32 %v2044, %v2060
    %v2063 = vmul.f32 %v2061, %v2061
    %v2064 = vmul.f32 %v2062, %v2062
    %v2065 = vsel %vm36, %v2063, 0.0
    %v2066 = vrot.slane %v2065, 4
    %v2067 = vadd.f32 %v2065, %v2066
    %v2068 = vrot.slane %v2067, 2
    %v2069 = vadd.f32 %v2067, %v2068
    %v2070 = vrot.slane %v2069, 1
    %v2071 = vadd.f32 %v2069, %v2070
    %v2072 = vsel %vm36, %v2064, 0.0
    %v2073 = vrot.slane %v2072, 4
    %v2074 = vadd.f32 %v2072, %v2073
    %v2075 = vrot.slane %v2074, 2
    %v2076 = vadd.f32 %v2074, %v2075
    %v2077 = vrot.slane %v2076, 1
    %v2078 = vadd.f32 %v2076, %v2077
    %v2079 = vmul.f32 %v2071, %v1829
    %v2080 = vmul.f32 %v2078, %v1829
    %v2081 = vadd.f32 %v2079, 1e-05
    %v2082 = vadd.f32 %v2080, 1e-05
    %v2083 = vrsqrt.pop %v2081
    %v2084 = vrsqrt.pop %v2082
    %v2085 = vmul.f32 %v2061, %v2083
    %v2086 = vmul.f32 %v2062, %v2084
    %v2087 = vlaneseq
    %v2088 = vshrl.u32 %v2087, 7
    %v2089 = vsub.s32 4, %v2088
    %v2090 = vrot.slane %v35, %v2089
    %v2091 = vmul.f32 %v2085, %v2090
    %v2092 = vmul.f32 %v2086, %v2090
    %v2093 = vlaneseq
    %v2094 = vshrl.u32 %v2093, 7
    %v2095 = vsub.s32 5, %v2094
    %v2096 = vrot.slane %v35, %v2095
    %v2097 = vadd.f32 %v2091, %v2096
    %v2098 = vadd.f32 %v2092, %v2096
    %2099 = vst.msk [vmem:[#allocation2] sm:$0xff] %vm36, %v2097
    %2100 = vst.msk [vmem:[#allocation2 + $0x8] sm:$0xff] %vm36, %v2098
    // Predicated region
    $region14: #{self_encoding_block.1} parent=1 // pred_check
      _
    $region15: #{self_encoding_block.1} parent=1 // pred_check_branch
      %2102 = sbr.rel (0) target = $region17
    $region16: #{self_encoding_block.1} parent=1 // pred_region
      %s2104 = ssub.s32 256, 256
      %2105 = vsyncadd [#allocation3], %s2104
      %s2106 = sshll.u32 [#allocation2], 4
      %s2107 = int_to_ptr.vmem [resolvable:$true] %s2106
      %2112 = dma.vmem_to_hbm [thread:$0]  %s2107, 256, %s3, [#allocation3], 128, 128, 8
    $region17: #{self_encoding_block.1} parent=1 // pred_fallthru
      _
    // Predicated region
    $region18: #{self_encoding_block.1} parent=1 // pred_check
      _
    $region19: #{self_encoding_block.1} parent=1 // pred_check_branch
      %2114 = sbr.rel (0) target = $region21
    $region20: #{self_encoding_block.1} parent=1 // pred_region
      %2115 = dma.done [#allocation3], 256
    $region21: #{self_encoding_block.1} parent=1 // pred_fallthru
      _
    %2116 = vsyncpa [#allocation3], 1

</llo_original>
